<compile_context>
chip_gen: v5e
topology: v5e:2x2
jax: 0.10.0
libtpu: 0.0.40
codegen_flags: <defaults>
</compile_context>

<pallas_src>
import jax
import jax.numpy as jnp
from jax import lax
from jax.experimental import pallas as pl
from jax.experimental.pallas import tpu as pltpu


def _round_up(x, m):
    return (x + m - 1) // m * m


# ----------------------------- static size plan -----------------------------


def _make_plan(H, W):
    """Per-image flat-slab plan (all Python ints).  Flat row stride = W."""
    S = W
    h1, w1 = H - 2, W - 2                   # conv1 (valid)
    h2, w2 = h1 - 2, w1 - 2                 # conv2
    hp1, wp1 = h2 // 2, w2 // 2             # pool1
    h3, w3 = hp1 - 2, wp1 - 2               # conv3
    h4, w4 = h3 - 2, w3 - 2                 # conv4
    hp2, wp2 = h4 // 2, w4 // 2             # pool2 (final spatial map)
    LM2 = (hp2 - 1) * 4 * S + (wp2 - 1) * 4 + 1   # pool2 slab length (dil 4 indexing)
    P4 = LM2 + 2 * S + 2                           # conv4 slab length
    P3 = P4 + 4 * S + 4                            # conv3 slab length
    LM1 = P3 + 4 * S + 4                           # pool1 slab length
    P2 = LM1 + S + 1                               # conv2 slab length
    P1 = P2 + 2 * S + 2                            # conv1 slab length
    L0 = P1 + 2 * S + 2                            # required input slab length
    return dict(S=S, L0=L0, hp2=hp2, wp2=wp2)


# ------------------------------- fused kernel --------------------------------


def _build_kernel(*, S, Lp, Bt, hp2, wp2, lens):
    L1, L2, L3, L4, L5, L6 = lens
    Lc = (Bt - 1) * Lp + 1                  # classifier dot width

    def conv3x3_relu(x, w_ref, b_ref, out_len, dil):
        # x: (Cin_p, Lin).  Fold the 9 taps into the contraction axis -> ONE matmul.
        taps = []
        for dy in range(3):
            for dx in range(3):
                off = (dy * S + dx) * dil
                taps.append(x[:, off:off + out_len])
        xk = jnp.concatenate(taps, axis=0)                     # (9*Cin_p, out_len)
        y = jnp.dot(w_ref[...], xk, preferred_element_type=jnp.float32)
        return jnp.maximum(y + b_ref[...], 0.0)                # bias is (Cout_p, 1)

    def maxpool2x2(x, out_len, dil):
        # Elementwise max of 4 shifted slabs (no subsample; later strides dilate).
        r = dil * S
        a = jnp.maximum(x[:, 0:out_len], x[:, dil:dil + out_len])
        b = jnp.maximum(x[:, r:r + out_len], x[:, r + dil:r + dil + out_len])
        return jnp.maximum(a, b)

    def kernel(x_ref, w1, b1, w2, b2, w3, b3, w4, b4, wl, bl, o_ref):
        x0 = x_ref[0].astype(jnp.float32)           # (Cin_p, LT0), Bt images on lanes
        a1 = conv3x3_relu(x0, w1, b1, L1, 1)        # conv_block_1
        a2 = conv3x3_relu(a1, w2, b2, L2, 1)
        m1 = maxpool2x2(a2, L3, 1)
        a3 = conv3x3_relu(m1, w3, b3, L4, 2)        # conv_block_2 (dilated flat index)
        a4 = conv3x3_relu(a3, w4, b4, L5, 2)
        m2 = maxpool2x2(a4, L6, 2)                  # (Hd_p, Bt*Lp)
        # classifier: one dot with K = hp2*wp2*Hd_p; valid logits sit at columns n*Lp.
        taps = []
        for ii in range(hp2):
            for jj in range(wp2):
                off = (ii * S + jj) * 4
                taps.append(m2[:, off:off + Lc])
        xk = jnp.concatenate(taps, axis=0)                      # (T*Hd_p, Lc)
        cls = jnp.dot(wl[...], xk, preferred_element_type=jnp.float32) + bl[...]
        cols = [cls[:, n * Lp:n * Lp + 1] for n in range(Bt)]   # (O, 1) each
        o_ref[0] = jnp.concatenate(cols, axis=1).astype(o_ref.dtype)   # (O, Bt)

    return kernel


def tinyvgg_forward(x_nchw, params, *, batch_tiles=1):
    # batch_tiles=1: whole batch in one grid step (best on v5e/v6e).
    # On v7x set batch_tiles=2 so the "parallel" grid axis splits across the two TCs.
    N, Cin, H, W = x_nchw.shape
    Hd = params["w1"].shape[-1]
    O = params["bl"].shape[0]
    assert N % batch_tiles == 0
    Bt = N // batch_tiles

    plan = _make_plan(H, W)
    S = plan["S"]
    hp2, wp2 = plan["hp2"], plan["wp2"]
    T = hp2 * wp2
    Lp = max(plan["L0"], H * W)             # per-image lane region (flat stride = S)

    Cin_p = _round_up(Cin, 8)               # sublane-align channels
    Hd_p = _round_up(Hd, 8)

    # Slab lengths per grid step: every layer's output is shorter by its max tap offset,
    # so all shifted slices stay in-bounds; valid per-image reads never cross images.
    m_c1 = 2 * S + 2                        # conv, dilation 1
    m_p1 = S + 1                            # pool, dilation 1
    m_c2 = 2 * (2 * S + 2)                  # conv, dilation 2
    m_p2 = 2 * (S + 1)                      # pool, dilation 2
    TAIL = 2 * m_c1 + m_p1 + 2 * m_c2 + m_p2
    LT0 = Bt * Lp + TAIL
    L1 = LT0 - m_c1
    L2 = L1 - m_c1
    L3 = L2 - m_p1
    L4 = L3 - m_c2
    L5 = L4 - m_c2
    L6 = L5 - m_p2                          # == Bt * Lp

    # ---- input: NCHW -> (batch_tiles, Cin_p, Bt*Lp + TAIL), channels on sublanes ----
    x = x_nchw.reshape(N, Cin, H * W).astype(jnp.float32)
    x = jnp.pad(x, ((0, 0), (0, Cin_p - Cin), (0, Lp - H * W)))
    x = x.reshape(batch_tiles, Bt, Cin_p, Lp).transpose(0, 2, 1, 3)
    x = x.reshape(batch_tiles, Cin_p, Bt * Lp)
    x = jnp.pad(x, ((0, 0), (0, 0), (0, TAIL)))

    # ---- conv weights HWIO -> (Cout_p, 9*Cin_p): taps folded into the K axis ----
    def prep_w(w_hwio, cin_p, cout_p):
        kh, kw, ci, co = w_hwio.shape
        w = jnp.pad(w_hwio, ((0, 0), (0, 0), (0, cin_p - ci), (0, cout_p - co)))
        return w.transpose(3, 0, 1, 2).reshape(cout_p, kh * kw * cin_p).astype(jnp.float32)

    def prep_b(b, cp):
        return jnp.pad(b, (0, cp - b.shape[0])).reshape(cp, 1).astype(jnp.float32)

    w1 = prep_w(params["w1"], Cin_p, Hd_p); b1 = prep_b(params["b1"], Hd_p)
    w2 = prep_w(params["w2"], Hd_p, Hd_p);  b2 = prep_b(params["b2"], Hd_p)
    w3 = prep_w(params["w3"], Hd_p, Hd_p);  b3 = prep_b(params["b3"], Hd_p)
    w4 = prep_w(params["w4"], Hd_p, Hd_p);  b4 = prep_b(params["b4"], Hd_p)

    # ---- classifier: PyTorch NCHW flatten order (c*T + ii*wp2 + jj) -> (O, T*Hd_p) ----
    wl = params["wl"].reshape(Hd, T, O).transpose(2, 1, 0)          # (O, T, Hd)
    wl = jnp.pad(wl, ((0, 0), (0, 0), (0, Hd_p - Hd)))
    wl = wl.reshape(O, T * Hd_p).astype(jnp.float32)
    bl = params["bl"].reshape(O, 1).astype(jnp.float32)

    kernel = _build_kernel(S=S, Lp=Lp, Bt=Bt, hp2=hp2, wp2=wp2,
                           lens=(L1, L2, L3, L4, L5, L6))

    out = pl.pallas_call(
        kernel,
        out_shape=jax.ShapeDtypeStruct((batch_tiles, O, Bt), jnp.float32),
        grid=(batch_tiles,),
        in_specs=[
            pl.BlockSpec((1, Cin_p, LT0), lambda g: (g, 0, 0)),
            pl.BlockSpec((Hd_p, 9 * Cin_p), lambda g: (0, 0)),
            pl.BlockSpec((Hd_p, 1), lambda g: (0, 0)),
            pl.BlockSpec((Hd_p, 9 * Hd_p), lambda g: (0, 0)),
            pl.BlockSpec((Hd_p, 1), lambda g: (0, 0)),
            pl.BlockSpec((Hd_p, 9 * Hd_p), lambda g: (0, 0)),
            pl.BlockSpec((Hd_p, 1), lambda g: (0, 0)),
            pl.BlockSpec((Hd_p, 9 * Hd_p), lambda g: (0, 0)),
            pl.BlockSpec((Hd_p, 1), lambda g: (0, 0)),
            pl.BlockSpec((O, T * Hd_p), lambda g: (0, 0)),
            pl.BlockSpec((O, 1), lambda g: (0, 0)),
        ],
        out_specs=pl.BlockSpec((1, O, Bt), lambda g: (g, 0, 0)),
        compiler_params=pltpu.CompilerParams(dimension_semantics=("parallel",)),
    )(x, w1, b1, w2, b2, w3, b3, w4, b4, wl, bl)

    # (batch_tiles, O, Bt) -> (N, O)
    return out.transpose(0, 2, 1).reshape(N, O).astype(x_nchw.dtype)


# ------------------------------- params / ref --------------------------------


def init_params(key, hidden, out_classes, flat_features):
    ks = jax.random.split(key, 5)

    def conv_w(k, cin, cout):
        w_oihw = jax.random.normal(k, (cout, cin, 3, 3), jnp.float32) / jnp.sqrt(9.0 * cin)
        return jnp.transpose(w_oihw, (2, 3, 1, 0))          # OIHW -> HWIO

    p = {}
    p["w1"] = conv_w(ks[0], 3, hidden)
    p["b1"] = jnp.zeros((hidden,), jnp.float32)
    p["w2"] = conv_w(ks[1], hidden, hidden)
    p["b2"] = jnp.full((hidden,), 0.01, jnp.float32)
    p["w3"] = conv_w(ks[2], hidden, hidden)
    p["b3"] = jnp.full((hidden,), -0.01, jnp.float32)
    p["w4"] = conv_w(ks[3], hidden, hidden)
    p["b4"] = jnp.full((hidden,), 0.02, jnp.float32)
    wl_of = jax.random.normal(ks[4], (out_classes, flat_features), jnp.float32) / jnp.sqrt(
        float(flat_features))
    p["wl"] = jnp.transpose(wl_of)                           # (F, O): y = x @ W + b
    p["bl"] = jnp.zeros((out_classes,), jnp.float32)
    return p


def tinyvgg_reference(x_nchw, params):
    # Pure-JAX reference (XLA convs) used only as a correctness check.
    x = jnp.transpose(x_nchw, (0, 2, 3, 1))

    def conv(x, w, b):
        y = lax.conv_general_dilated(
            x, w, (1, 1), "VALID", dimension_numbers=("NHWC", "HWIO", "NHWC"))
        return jnp.maximum(y + b, 0.0)

    def pool(x):
        return lax.reduce_window(
            x, -jnp.inf, lax.max, (1, 2, 2, 1), (1, 2, 2, 1), "VALID")

    x = conv(x, params["w1"], params["b1"])
    x = conv(x, params["w2"], params["b2"])
    x = pool(x)
    x = conv(x, params["w3"], params["b3"])
    x = conv(x, params["w4"], params["b4"])
    x = pool(x)
    x = jnp.transpose(x, (0, 3, 1, 2)).reshape(x.shape[0], -1)   # PyTorch NCHW flatten
    return x @ params["wl"] + params["bl"]


if __name__ == "__main__":
    batch, in_ch, spatial = 2, 3, 24
    hidden, out_classes = 8, 3

    key = jax.random.PRNGKey(0)
    kx, kp = jax.random.split(key)
    x = jax.random.normal(kx, (batch, in_ch, spatial, spatial), jnp.float32)

    # spatial trace: 24 -> 22 -> 20 -> pool 10 -> 8 -> 6 -> pool 3
    plan = _make_plan(spatial, spatial)
    flat_features = hidden * plan["hp2"] * plan["wp2"]
    params = init_params(kp, hidden, out_classes, flat_features)

    out = jax.jit(tinyvgg_forward)(x, params)
    out = jax.block_until_ready(out)

    ref = tinyvgg_reference(x, params)
    assert out.shape == (batch, out_classes)
    assert jnp.allclose(out, ref, atol=1e-3, rtol=1e-3)
    print("KERNEL_OK")
</pallas_src>

<mosaic_0001>
module attributes {stable_mosaic.version = 11 : i64} {
  func.func @kernel(%arg0: i32, %arg1: memref<1x8x1527xf32, #tpu.memory_space<vmem>>, %arg2: memref<8x72xf32, #tpu.memory_space<vmem>>, %arg3: memref<8x1xf32, #tpu.memory_space<vmem>>, %arg4: memref<8x72xf32, #tpu.memory_space<vmem>>, %arg5: memref<8x1xf32, #tpu.memory_space<vmem>>, %arg6: memref<8x72xf32, #tpu.memory_space<vmem>>, %arg7: memref<8x1xf32, #tpu.memory_space<vmem>>, %arg8: memref<8x72xf32, #tpu.memory_space<vmem>>, %arg9: memref<8x1xf32, #tpu.memory_space<vmem>>, %arg10: memref<3x72xf32, #tpu.memory_space<vmem>>, %arg11: memref<3x1xf32, #tpu.memory_space<vmem>>, %arg12: memref<1x3x2xf32, #tpu.memory_space<vmem>>) attributes {dimension_semantics = [#tpu.dimension_semantics<parallel>], iteration_bounds = array<i64: 1>, scalar_prefetch = 0 : i64, scratch_operands = 0 : i64, tpu.core_type = #tpu.core_type<tc>, window_params = [{transform_indices = @transform_0, window_bounds = array<i64: 1, 8, 1527>}, {pipeline_mode = #tpu.pipeline_mode<synchronous>, transform_indices = @transform_1, window_bounds = array<i64: 8, 72>}, {pipeline_mode = #tpu.pipeline_mode<synchronous>, transform_indices = @transform_2, window_bounds = array<i64: 8, 1>}, {pipeline_mode = #tpu.pipeline_mode<synchronous>, transform_indices = @transform_3, window_bounds = array<i64: 8, 72>}, {pipeline_mode = #tpu.pipeline_mode<synchronous>, transform_indices = @transform_4, window_bounds = array<i64: 8, 1>}, {pipeline_mode = #tpu.pipeline_mode<synchronous>, transform_indices = @transform_5, window_bounds = array<i64: 8, 72>}, {pipeline_mode = #tpu.pipeline_mode<synchronous>, transform_indices = @transform_6, window_bounds = array<i64: 8, 1>}, {pipeline_mode = #tpu.pipeline_mode<synchronous>, transform_indices = @transform_7, window_bounds = array<i64: 8, 72>}, {pipeline_mode = #tpu.pipeline_mode<synchronous>, transform_indices = @transform_8, window_bounds = array<i64: 8, 1>}, {pipeline_mode = #tpu.pipeline_mode<synchronous>, transform_indices = @transform_9, window_bounds = array<i64: 3, 72>}, {pipeline_mode = #tpu.pipeline_mode<synchronous>, transform_indices = @transform_10, window_bounds = array<i64: 3, 1>}, {transform_indices = @transform_11, window_bounds = array<i64: 1, 3, 2>}]} {
    %c0 = arith.constant 0 : index
    %c0_0 = arith.constant 0 : index
    %c0_1 = arith.constant 0 : index
    %0 = vector.load %arg1[%c0, %c0_0, %c0_1] : memref<1x8x1527xf32, #tpu.memory_space<vmem>>, vector<1x8x1527xf32>
    %1 = vector.shape_cast %0 : vector<1x8x1527xf32> to vector<8x1527xf32>
    %2 = vector.extract_strided_slice %1 {offsets = [0, 0], sizes = [8, 1477], strides = [1, 1]} : vector<8x1527xf32> to vector<8x1477xf32>
    %3 = vector.extract_strided_slice %1 {offsets = [0, 1], sizes = [8, 1477], strides = [1, 1]} : vector<8x1527xf32> to vector<8x1477xf32>
    %4 = vector.extract_strided_slice %1 {offsets = [0, 2], sizes = [8, 1477], strides = [1, 1]} : vector<8x1527xf32> to vector<8x1477xf32>
    %5 = vector.extract_strided_slice %1 {offsets = [0, 24], sizes = [8, 1477], strides = [1, 1]} : vector<8x1527xf32> to vector<8x1477xf32>
    %6 = vector.extract_strided_slice %1 {offsets = [0, 25], sizes = [8, 1477], strides = [1, 1]} : vector<8x1527xf32> to vector<8x1477xf32>
    %7 = vector.extract_strided_slice %1 {offsets = [0, 26], sizes = [8, 1477], strides = [1, 1]} : vector<8x1527xf32> to vector<8x1477xf32>
    %8 = vector.extract_strided_slice %1 {offsets = [0, 48], sizes = [8, 1477], strides = [1, 1]} : vector<8x1527xf32> to vector<8x1477xf32>
    %9 = vector.extract_strided_slice %1 {offsets = [0, 49], sizes = [8, 1477], strides = [1, 1]} : vector<8x1527xf32> to vector<8x1477xf32>
    %10 = vector.extract_strided_slice %1 {offsets = [0, 50], sizes = [8, 1477], strides = [1, 1]} : vector<8x1527xf32> to vector<8x1477xf32>
    %11 = tpu.concatenate %2, %3, %4, %5, %6, %7, %8, %9, %10 in 0 : vector<8x1477xf32>, vector<8x1477xf32>, vector<8x1477xf32>, vector<8x1477xf32>, vector<8x1477xf32>, vector<8x1477xf32>, vector<8x1477xf32>, vector<8x1477xf32>, vector<8x1477xf32> -> vector<72x1477xf32>
    %c0_2 = arith.constant 0 : index
    %c0_3 = arith.constant 0 : index
    %12 = vector.load %arg2[%c0_2, %c0_3] : memref<8x72xf32, #tpu.memory_space<vmem>>, vector<8x72xf32>
    %cst = arith.constant dense<0.000000e+00> : vector<8x1477xf32>
    %13 = tpu.matmul %12, %11, %cst {dimension_numbers = #tpu.dot_dimension_numbers<[1], [0], [0], [1], [0, 0, 1, 1], [], []>} : vector<8x72xf32>, vector<72x1477xf32>, vector<8x1477xf32> -> vector<8x1477xf32>
    %c0_4 = arith.constant 0 : index
    %c0_5 = arith.constant 0 : index
    %14 = vector.load %arg3[%c0_4, %c0_5] : memref<8x1xf32, #tpu.memory_space<vmem>>, vector<8x1xf32>
    %15 = vector.broadcast %14 : vector<8x1xf32> to vector<8x1477xf32>
    %16 = arith.addf %13, %15 : vector<8x1477xf32>
    %cst_6 = arith.constant 0.000000e+00 : f32
    %17 = vector.broadcast %cst_6 : f32 to vector<8x1477xf32>
    %18 = arith.maximumf %16, %17 : vector<8x1477xf32>
    %19 = vector.extract_strided_slice %18 {offsets = [0, 0], sizes = [8, 1427], strides = [1, 1]} : vector<8x1477xf32> to vector<8x1427xf32>
    %20 = vector.extract_strided_slice %18 {offsets = [0, 1], sizes = [8, 1427], strides = [1, 1]} : vector<8x1477xf32> to vector<8x1427xf32>
    %21 = vector.extract_strided_slice %18 {offsets = [0, 2], sizes = [8, 1427], strides = [1, 1]} : vector<8x1477xf32> to vector<8x1427xf32>
    %22 = vector.extract_strided_slice %18 {offsets = [0, 24], sizes = [8, 1427], strides = [1, 1]} : vector<8x1477xf32> to vector<8x1427xf32>
    %23 = vector.extract_strided_slice %18 {offsets = [0, 25], sizes = [8, 1427], strides = [1, 1]} : vector<8x1477xf32> to vector<8x1427xf32>
    %24 = vector.extract_strided_slice %18 {offsets = [0, 26], sizes = [8, 1427], strides = [1, 1]} : vector<8x1477xf32> to vector<8x1427xf32>
    %25 = vector.extract_strided_slice %18 {offsets = [0, 48], sizes = [8, 1427], strides = [1, 1]} : vector<8x1477xf32> to vector<8x1427xf32>
    %26 = vector.extract_strided_slice %18 {offsets = [0, 49], sizes = [8, 1427], strides = [1, 1]} : vector<8x1477xf32> to vector<8x1427xf32>
    %27 = vector.extract_strided_slice %18 {offsets = [0, 50], sizes = [8, 1427], strides = [1, 1]} : vector<8x1477xf32> to vector<8x1427xf32>
    %28 = tpu.concatenate %19, %20, %21, %22, %23, %24, %25, %26, %27 in 0 : vector<8x1427xf32>, vector<8x1427xf32>, vector<8x1427xf32>, vector<8x1427xf32>, vector<8x1427xf32>, vector<8x1427xf32>, vector<8x1427xf32>, vector<8x1427xf32>, vector<8x1427xf32> -> vector<72x1427xf32>
    %c0_7 = arith.constant 0 : index
    %c0_8 = arith.constant 0 : index
    %29 = vector.load %arg4[%c0_7, %c0_8] : memref<8x72xf32, #tpu.memory_space<vmem>>, vector<8x72xf32>
    %cst_9 = arith.constant dense<0.000000e+00> : vector<8x1427xf32>
    %30 = tpu.matmul %29, %28, %cst_9 {dimension_numbers = #tpu.dot_dimension_numbers<[1], [0], [0], [1], [0, 0, 1, 1], [], []>} : vector<8x72xf32>, vector<72x1427xf32>, vector<8x1427xf32> -> vector<8x1427xf32>
    %c0_10 = arith.constant 0 : index
    %c0_11 = arith.constant 0 : index
    %31 = vector.load %arg5[%c0_10, %c0_11] : memref<8x1xf32, #tpu.memory_space<vmem>>, vector<8x1xf32>
    %32 = vector.broadcast %31 : vector<8x1xf32> to vector<8x1427xf32>
    %33 = arith.addf %30, %32 : vector<8x1427xf32>
    %cst_12 = arith.constant 0.000000e+00 : f32
    %34 = vector.broadcast %cst_12 : f32 to vector<8x1427xf32>
    %35 = arith.maximumf %33, %34 : vector<8x1427xf32>
    %36 = vector.extract_strided_slice %35 {offsets = [0, 0], sizes = [8, 1402], strides = [1, 1]} : vector<8x1427xf32> to vector<8x1402xf32>
    %37 = vector.extract_strided_slice %35 {offsets = [0, 1], sizes = [8, 1402], strides = [1, 1]} : vector<8x1427xf32> to vector<8x1402xf32>
    %38 = arith.maximumf %36, %37 : vector<8x1402xf32>
    %39 = vector.extract_strided_slice %35 {offsets = [0, 24], sizes = [8, 1402], strides = [1, 1]} : vector<8x1427xf32> to vector<8x1402xf32>
    %40 = vector.extract_strided_slice %35 {offsets = [0, 25], sizes = [8, 1402], strides = [1, 1]} : vector<8x1427xf32> to vector<8x1402xf32>
    %41 = arith.maximumf %39, %40 : vector<8x1402xf32>
    %42 = arith.maximumf %38, %41 : vector<8x1402xf32>
    %43 = vector.extract_strided_slice %42 {offsets = [0, 0], sizes = [8, 1302], strides = [1, 1]} : vector<8x1402xf32> to vector<8x1302xf32>
    %44 = vector.extract_strided_slice %42 {offsets = [0, 2], sizes = [8, 1302], strides = [1, 1]} : vector<8x1402xf32> to vector<8x1302xf32>
    %45 = vector.extract_strided_slice %42 {offsets = [0, 4], sizes = [8, 1302], strides = [1, 1]} : vector<8x1402xf32> to vector<8x1302xf32>
    %46 = vector.extract_strided_slice %42 {offsets = [0, 48], sizes = [8, 1302], strides = [1, 1]} : vector<8x1402xf32> to vector<8x1302xf32>
    %47 = vector.extract_strided_slice %42 {offsets = [0, 50], sizes = [8, 1302], strides = [1, 1]} : vector<8x1402xf32> to vector<8x1302xf32>
    %48 = vector.extract_strided_slice %42 {offsets = [0, 52], sizes = [8, 1302], strides = [1, 1]} : vector<8x1402xf32> to vector<8x1302xf32>
    %49 = vector.extract_strided_slice %42 {offsets = [0, 96], sizes = [8, 1302], strides = [1, 1]} : vector<8x1402xf32> to vector<8x1302xf32>
    %50 = vector.extract_strided_slice %42 {offsets = [0, 98], sizes = [8, 1302], strides = [1, 1]} : vector<8x1402xf32> to vector<8x1302xf32>
    %51 = vector.extract_strided_slice %42 {offsets = [0, 100], sizes = [8, 1302], strides = [1, 1]} : vector<8x1402xf32> to vector<8x1302xf32>
    %52 = tpu.concatenate %43, %44, %45, %46, %47, %48, %49, %50, %51 in 0 : vector<8x1302xf32>, vector<8x1302xf32>, vector<8x1302xf32>, vector<8x1302xf32>, vector<8x1302xf32>, vector<8x1302xf32>, vector<8x1302xf32>, vector<8x1302xf32>, vector<8x1302xf32> -> vector<72x1302xf32>
    %c0_13 = arith.constant 0 : index
    %c0_14 = arith.constant 0 : index
    %53 = vector.load %arg6[%c0_13, %c0_14] : memref<8x72xf32, #tpu.memory_space<vmem>>, vector<8x72xf32>
    %cst_15 = arith.constant dense<0.000000e+00> : vector<8x1302xf32>
    %54 = tpu.matmul %53, %52, %cst_15 {dimension_numbers = #tpu.dot_dimension_numbers<[1], [0], [0], [1], [0, 0, 1, 1], [], []>} : vector<8x72xf32>, vector<72x1302xf32>, vector<8x1302xf32> -> vector<8x1302xf32>
    %c0_16 = arith.constant 0 : index
    %c0_17 = arith.constant 0 : index
    %55 = vector.load %arg7[%c0_16, %c0_17] : memref<8x1xf32, #tpu.memory_space<vmem>>, vector<8x1xf32>
    %56 = vector.broadcast %55 : vector<8x1xf32> to vector<8x1302xf32>
    %57 = arith.addf %54, %56 : vector<8x1302xf32>
    %cst_18 = arith.constant 0.000000e+00 : f32
    %58 = vector.broadcast %cst_18 : f32 to vector<8x1302xf32>
    %59 = arith.maximumf %57, %58 : vector<8x1302xf32>
    %60 = vector.extract_strided_slice %59 {offsets = [0, 0], sizes = [8, 1202], strides = [1, 1]} : vector<8x1302xf32> to vector<8x1202xf32>
    %61 = vector.extract_strided_slice %59 {offsets = [0, 2], sizes = [8, 1202], strides = [1, 1]} : vector<8x1302xf32> to vector<8x1202xf32>
    %62 = vector.extract_strided_slice %59 {offsets = [0, 4], sizes = [8, 1202], strides = [1, 1]} : vector<8x1302xf32> to vector<8x1202xf32>
    %63 = vector.extract_strided_slice %59 {offsets = [0, 48], sizes = [8, 1202], strides = [1, 1]} : vector<8x1302xf32> to vector<8x1202xf32>
    %64 = vector.extract_strided_slice %59 {offsets = [0, 50], sizes = [8, 1202], strides = [1, 1]} : vector<8x1302xf32> to vector<8x1202xf32>
    %65 = vector.extract_strided_slice %59 {offsets = [0, 52], sizes = [8, 1202], strides = [1, 1]} : vector<8x1302xf32> to vector<8x1202xf32>
    %66 = vector.extract_strided_slice %59 {offsets = [0, 96], sizes = [8, 1202], strides = [1, 1]} : vector<8x1302xf32> to vector<8x1202xf32>
    %67 = vector.extract_strided_slice %59 {offsets = [0, 98], sizes = [8, 1202], strides = [1, 1]} : vector<8x1302xf32> to vector<8x1202xf32>
    %68 = vector.extract_strided_slice %59 {offsets = [0, 100], sizes = [8, 1202], strides = [1, 1]} : vector<8x1302xf32> to vector<8x1202xf32>
    %69 = tpu.concatenate %60, %61, %62, %63, %64, %65, %66, %67, %68 in 0 : vector<8x1202xf32>, vector<8x1202xf32>, vector<8x1202xf32>, vector<8x1202xf32>, vector<8x1202xf32>, vector<8x1202xf32>, vector<8x1202xf32>, vector<8x1202xf32>, vector<8x1202xf32> -> vector<72x1202xf32>
    %c0_19 = arith.constant 0 : index
    %c0_20 = arith.constant 0 : index
    %70 = vector.load %arg8[%c0_19, %c0_20] : memref<8x72xf32, #tpu.memory_space<vmem>>, vector<8x72xf32>
    %cst_21 = arith.constant dense<0.000000e+00> : vector<8x1202xf32>
    %71 = tpu.matmul %70, %69, %cst_21 {dimension_numbers = #tpu.dot_dimension_numbers<[1], [0], [0], [1], [0, 0, 1, 1], [], []>} : vector<8x72xf32>, vector<72x1202xf32>, vector<8x1202xf32> -> vector<8x1202xf32>
    %c0_22 = arith.constant 0 : index
    %c0_23 = arith.constant 0 : index
    %72 = vector.load %arg9[%c0_22, %c0_23] : memref<8x1xf32, #tpu.memory_space<vmem>>, vector<8x1xf32>
    %73 = vector.broadcast %72 : vector<8x1xf32> to vector<8x1202xf32>
    %74 = arith.addf %71, %73 : vector<8x1202xf32>
    %cst_24 = arith.constant 0.000000e+00 : f32
    %75 = vector.broadcast %cst_24 : f32 to vector<8x1202xf32>
    %76 = arith.maximumf %74, %75 : vector<8x1202xf32>
    %77 = vector.extract_strided_slice %76 {offsets = [0, 0], sizes = [8, 1152], strides = [1, 1]} : vector<8x1202xf32> to vector<8x1152xf32>
    %78 = vector.extract_strided_slice %76 {offsets = [0, 2], sizes = [8, 1152], strides = [1, 1]} : vector<8x1202xf32> to vector<8x1152xf32>
    %79 = arith.maximumf %77, %78 : vector<8x1152xf32>
    %80 = vector.extract_strided_slice %76 {offsets = [0, 48], sizes = [8, 1152], strides = [1, 1]} : vector<8x1202xf32> to vector<8x1152xf32>
    %81 = vector.extract_strided_slice %76 {offsets = [0, 50], sizes = [8, 1152], strides = [1, 1]} : vector<8x1202xf32> to vector<8x1152xf32>
    %82 = arith.maximumf %80, %81 : vector<8x1152xf32>
    %83 = arith.maximumf %79, %82 : vector<8x1152xf32>
    %84 = vector.extract_strided_slice %83 {offsets = [0, 0], sizes = [8, 577], strides = [1, 1]} : vector<8x1152xf32> to vector<8x577xf32>
    %85 = vector.extract_strided_slice %83 {offsets = [0, 4], sizes = [8, 577], strides = [1, 1]} : vector<8x1152xf32> to vector<8x577xf32>
    %86 = vector.extract_strided_slice %83 {offsets = [0, 8], sizes = [8, 577], strides = [1, 1]} : vector<8x1152xf32> to vector<8x577xf32>
    %87 = vector.extract_strided_slice %83 {offsets = [0, 96], sizes = [8, 577], strides = [1, 1]} : vector<8x1152xf32> to vector<8x577xf32>
    %88 = vector.extract_strided_slice %83 {offsets = [0, 100], sizes = [8, 577], strides = [1, 1]} : vector<8x1152xf32> to vector<8x577xf32>
    %89 = vector.extract_strided_slice %83 {offsets = [0, 104], sizes = [8, 577], strides = [1, 1]} : vector<8x1152xf32> to vector<8x577xf32>
    %90 = vector.extract_strided_slice %83 {offsets = [0, 192], sizes = [8, 577], strides = [1, 1]} : vector<8x1152xf32> to vector<8x577xf32>
    %91 = vector.extract_strided_slice %83 {offsets = [0, 196], sizes = [8, 577], strides = [1, 1]} : vector<8x1152xf32> to vector<8x577xf32>
    %92 = vector.extract_strided_slice %83 {offsets = [0, 200], sizes = [8, 577], strides = [1, 1]} : vector<8x1152xf32> to vector<8x577xf32>
    %93 = tpu.concatenate %84, %85, %86, %87, %88, %89, %90, %91, %92 in 0 : vector<8x577xf32>, vector<8x577xf32>, vector<8x577xf32>, vector<8x577xf32>, vector<8x577xf32>, vector<8x577xf32>, vector<8x577xf32>, vector<8x577xf32>, vector<8x577xf32> -> vector<72x577xf32>
    %c0_25 = arith.constant 0 : index
    %c0_26 = arith.constant 0 : index
    %94 = vector.load %arg10[%c0_25, %c0_26] : memref<3x72xf32, #tpu.memory_space<vmem>>, vector<3x72xf32>
    %cst_27 = arith.constant dense<0.000000e+00> : vector<3x577xf32>
    %95 = tpu.matmul %94, %93, %cst_27 {dimension_numbers = #tpu.dot_dimension_numbers<[1], [0], [0], [1], [0, 0, 1, 1], [], []>} : vector<3x72xf32>, vector<72x577xf32>, vector<3x577xf32> -> vector<3x577xf32>
    %c0_28 = arith.constant 0 : index
    %c0_29 = arith.constant 0 : index
    %96 = vector.load %arg11[%c0_28, %c0_29] : memref<3x1xf32, #tpu.memory_space<vmem>>, vector<3x1xf32>
    %97 = vector.broadcast %96 : vector<3x1xf32> to vector<3x577xf32>
    %98 = arith.addf %95, %97 : vector<3x577xf32>
    %99 = vector.extract_strided_slice %98 {offsets = [0, 0], sizes = [3, 1], strides = [1, 1]} : vector<3x577xf32> to vector<3x1xf32>
    %100 = vector.extract_strided_slice %98 {offsets = [0, 576], sizes = [3, 1], strides = [1, 1]} : vector<3x577xf32> to vector<3x1xf32>
    %101 = tpu.concatenate %99, %100 in 1 : vector<3x1xf32>, vector<3x1xf32> -> vector<3x2xf32>
    %c0_30 = arith.constant 0 : index
    %c0_31 = arith.constant 0 : index
    %c0_32 = arith.constant 0 : index
    %102 = vector.load %arg12[%c0_30, %c0_31, %c0_32] : memref<1x3x2xf32, #tpu.memory_space<vmem>>, vector<1x3x2xf32>
    %103 = vector.shape_cast %102 : vector<1x3x2xf32> to vector<3x2xf32>
    %104 = vector.shape_cast %101 : vector<3x2xf32> to vector<1x3x2xf32>
    tpu.vector_store %arg12[%c0_30, %c0_31, %c0_32], %104 {strides = array<i32>} : memref<1x3x2xf32, #tpu.memory_space<vmem>>, vector<1x3x2xf32>,
    return
  }
  func.func @transform_0(%arg0: i32) -> (i32, i32, i32) {
    %c0_i32 = arith.constant 0 : i32
    %c0_i32_0 = arith.constant 0 : i32
    %c0_i32_1 = arith.constant 0 : i32
    return %arg0, %c0_i32, %c0_i32_0 : i32, i32, i32
  }
  func.func @transform_1(%arg0: i32) -> (i32, i32) {
    %c0_i32 = arith.constant 0 : i32
    %c0_i32_0 = arith.constant 0 : i32
    %c0_i32_1 = arith.constant 0 : i32
    return %c0_i32, %c0_i32_0 : i32, i32
  }
  func.func @transform_2(%arg0: i32) -> (i32, i32) {
    %c0_i32 = arith.constant 0 : i32
    %c0_i32_0 = arith.constant 0 : i32
    %c0_i32_1 = arith.constant 0 : i32
    return %c0_i32, %c0_i32_0 : i32, i32
  }
  func.func @transform_3(%arg0: i32) -> (i32, i32) {
    %c0_i32 = arith.constant 0 : i32
    %c0_i32_0 = arith.constant 0 : i32
    %c0_i32_1 = arith.constant 0 : i32
    return %c0_i32, %c0_i32_0 : i32, i32
  }
  func.func @transform_4(%arg0: i32) -> (i32, i32) {
    %c0_i32 = arith.constant 0 : i32
    %c0_i32_0 = arith.constant 0 : i32
    %c0_i32_1 = arith.constant 0 : i32
    return %c0_i32, %c0_i32_0 : i32, i32
  }
  func.func @transform_5(%arg0: i32) -> (i32, i32) {
    %c0_i32 = arith.constant 0 : i32
    %c0_i32_0 = arith.constant 0 : i32
    %c0_i32_1 = arith.constant 0 : i32
    return %c0_i32, %c0_i32_0 : i32, i32
  }
  func.func @transform_6(%arg0: i32) -> (i32, i32) {
    %c0_i32 = arith.constant 0 : i32
    %c0_i32_0 = arith.constant 0 : i32
    %c0_i32_1 = arith.constant 0 : i32
    return %c0_i32, %c0_i32_0 : i32, i32
  }
  func.func @transform_7(%arg0: i32) -> (i32, i32) {
    %c0_i32 = arith.constant 0 : i32
    %c0_i32_0 = arith.constant 0 : i32
    %c0_i32_1 = arith.constant 0 : i32
    return %c0_i32, %c0_i32_0 : i32, i32
  }
  func.func @transform_8(%arg0: i32) -> (i32, i32) {
    %c0_i32 = arith.constant 0 : i32
    %c0_i32_0 = arith.constant 0 : i32
    %c0_i32_1 = arith.constant 0 : i32
    return %c0_i32, %c0_i32_0 : i32, i32
  }
  func.func @transform_9(%arg0: i32) -> (i32, i32) {
    %c0_i32 = arith.constant 0 : i32
    %c0_i32_0 = arith.constant 0 : i32
    %c0_i32_1 = arith.constant 0 : i32
    return %c0_i32, %c0_i32_0 : i32, i32
  }
  func.func @transform_10(%arg0: i32) -> (i32, i32) {
    %c0_i32 = arith.constant 0 : i32
    %c0_i32_0 = arith.constant 0 : i32
    %c0_i32_1 = arith.constant 0 : i32
    return %c0_i32, %c0_i32_0 : i32, i32
  }
  func.func @transform_11(%arg0: i32) -> (i32, i32, i32) {
    %c0_i32 = arith.constant 0 : i32
    %c0_i32_0 = arith.constant 0 : i32
    %c0_i32_1 = arith.constant 0 : i32
    return %arg0, %c0_i32, %c0_i32_0 : i32, i32, i32
  }
}

</mosaic_0001>

<llo_original>
// kernel: tinyvgg_forward.1
$region0: #{tinyvgg_forward.1}
  #allocation0 [shape = 'u32[]', space=smem, size = 0x4, offset = 0x4, fixed_abs, tag = 'smem constant byte address 0x4 - core index']
  #allocation1 [shape = 'u32[72,128]{1,0:T(1,128)}', space=vmem, size = 0x9000, scoped, tag = 'internal scratch']
  %s0 = inlined_call_operand.vmem [shape: f32[1,8,1527], index: 0, kind: input, shape index: {}]
  %s1 = inlined_call_operand.vmem [shape: f32[8,72], index: 1, kind: input, shape index: {}]
  %s2 = inlined_call_operand.vmem [shape: f32[8,1], index: 2, kind: input, shape index: {}]
  %s3 = inlined_call_operand.vmem [shape: f32[8,72], index: 3, kind: input, shape index: {}]
  %s4 = inlined_call_operand.vmem [shape: f32[8,1], index: 4, kind: input, shape index: {}]
  %s5 = inlined_call_operand.vmem [shape: f32[8,72], index: 5, kind: input, shape index: {}]
  %s6 = inlined_call_operand.vmem [shape: f32[8,1], index: 6, kind: input, shape index: {}]
  %s7 = inlined_call_operand.vmem [shape: f32[8,72], index: 7, kind: input, shape index: {}]
  %s8 = inlined_call_operand.vmem [shape: f32[8,1], index: 8, kind: input, shape index: {}]
  %s9 = inlined_call_operand.vmem [shape: f32[3,72], index: 9, kind: input, shape index: {}]
  %s10 = inlined_call_operand.vmem [shape: f32[3,1], index: 10, kind: input, shape index: {}]
  %s11 = inlined_call_operand.vmem [shape: f32[1,3,2], index: 11, kind: output, shape index: {}]
  %s12 = sld [smem:[#allocation0]]
  $region54: #{tinyvgg_forward.1} parent=0
    _
  %s14 = ssub.s32 1, %s12
  %s15 = scalar_select 0, %s14, %s12
  // Predicated region
  $region2: #{tinyvgg_forward.1} parent=0 // pred_check
    _
  $region3: #{tinyvgg_forward.1} parent=0 // pred_check_branch
    %17 = sbr.rel (0) target = $region5
  $region4: #{tinyvgg_forward.1} parent=0 // pred_region
    _
  $region5: #{tinyvgg_forward.1} parent=0 // pred_fallthru
    _
  // Predicated region
  $region6: #{tinyvgg_forward.1} parent=0 // pred_check
    _
  $region7: #{tinyvgg_forward.1} parent=0 // pred_check_branch
    %19 = sbr.rel (0) target = $region9
  $region8: #{tinyvgg_forward.1} parent=0 // pred_region
    _
  $region9: #{tinyvgg_forward.1} parent=0 // pred_fallthru
    _
  // Predicated region
  $region10: #{tinyvgg_forward.1} parent=0 // pred_check
    _
  $region11: #{tinyvgg_forward.1} parent=0 // pred_check_branch
    %21 = sbr.rel (0) target = $region13
  $region12: #{tinyvgg_forward.1} parent=0 // pred_region
    _
  $region13: #{tinyvgg_forward.1} parent=0 // pred_fallthru
    _
  // Predicated region
  $region14: #{tinyvgg_forward.1} parent=0 // pred_check
    _
  $region15: #{tinyvgg_forward.1} parent=0 // pred_check_branch
    %23 = sbr.rel (0) target = $region17
  $region16: #{tinyvgg_forward.1} parent=0 // pred_region
    _
  $region17: #{tinyvgg_forward.1} parent=0 // pred_fallthru
    _
  // Predicated region
  $region18: #{tinyvgg_forward.1} parent=0 // pred_check
    _
  $region19: #{tinyvgg_forward.1} parent=0 // pred_check_branch
    %25 = sbr.rel (0) target = $region21
  $region20: #{tinyvgg_forward.1} parent=0 // pred_region
    _
  $region21: #{tinyvgg_forward.1} parent=0 // pred_fallthru
    _
  // Predicated region
  $region22: #{tinyvgg_forward.1} parent=0 // pred_check
    _
  $region23: #{tinyvgg_forward.1} parent=0 // pred_check_branch
    %27 = sbr.rel (0) target = $region25
  $region24: #{tinyvgg_forward.1} parent=0 // pred_region
    _
  $region25: #{tinyvgg_forward.1} parent=0 // pred_fallthru
    _
  // Predicated region
  $region26: #{tinyvgg_forward.1} parent=0 // pred_check
    _
  $region27: #{tinyvgg_forward.1} parent=0 // pred_check_branch
    %29 = sbr.rel (0) target = $region29
  $region28: #{tinyvgg_forward.1} parent=0 // pred_region
    _
  $region29: #{tinyvgg_forward.1} parent=0 // pred_fallthru
    _
  // Predicated region
  $region30: #{tinyvgg_forward.1} parent=0 // pred_check
    _
  $region31: #{tinyvgg_forward.1} parent=0 // pred_check_branch
    %31 = sbr.rel (0) target = $region33
  $region32: #{tinyvgg_forward.1} parent=0 // pred_region
    _
  $region33: #{tinyvgg_forward.1} parent=0 // pred_fallthru
    _
  // Predicated region
  $region34: #{tinyvgg_forward.1} parent=0 // pred_check
    _
  $region35: #{tinyvgg_forward.1} parent=0 // pred_check_branch
    %33 = sbr.rel (0) target = $region37
  $region36: #{tinyvgg_forward.1} parent=0 // pred_region
    _
  $region37: #{tinyvgg_forward.1} parent=0 // pred_fallthru
    _
  // Predicated region
  $region38: #{tinyvgg_forward.1} parent=0 // pred_check
    _
  $region39: #{tinyvgg_forward.1} parent=0 // pred_check_branch
    %35 = sbr.rel (0) target = $region41
  $region40: #{tinyvgg_forward.1} parent=0 // pred_region
    _
  $region41: #{tinyvgg_forward.1} parent=0 // pred_fallthru
    _
  // Predicated region
  $region42: #{tinyvgg_forward.1} parent=0 // pred_check
    _
  $region43: #{tinyvgg_forward.1} parent=0 // pred_check_branch
    %37 = sbr.rel (0) target = $region45
  $region44: #{tinyvgg_forward.1} parent=0 // pred_region
    _
  $region45: #{tinyvgg_forward.1} parent=0 // pred_fallthru
    _
  %v38 = vld [vmem:[%s0] sm:$0xff]
  %v39 = vld [vmem:[%s0 + $0x8] sm:$0xff]
  %v40 = vld [vmem:[%s0 + $0x10] sm:$0xff]
  %v41 = vld [vmem:[%s0 + $0x18] sm:$0xff]
  %v42 = vld [vmem:[%s0 + $0x20] sm:$0xff]
  %v43 = vld [vmem:[%s0 + $0x28] sm:$0xff]
  %v44 = vld [vmem:[%s0 + $0x30] sm:$0xff]
  %v45 = vld [vmem:[%s0 + $0x38] sm:$0xff]
  %v46 = vld [vmem:[%s0 + $0x40] sm:$0xff]
  %v47 = vld [vmem:[%s0 + $0x48] sm:$0xff]
  %v48 = vld [vmem:[%s0 + $0x50] sm:$0xff]
  %v49 = vld [vmem:[%s0 + $0x58] sm:$0xff]
  %62 = vrot.lane.b32.xlu0 %v38, 127
  %v63 = vpop.permute.xlu0 %62
  %64 = vrot.lane.b32.xlu0 %v39, 127
  %v65 = vpop.permute.xlu0 %64
  %66 = vrot.lane.b32.xlu0 %v40, 127
  %v67 = vpop.permute.xlu0 %66
  %68 = vrot.lane.b32.xlu0 %v41, 127
  %v69 = vpop.permute.xlu0 %68
  %70 = vrot.lane.b32.xlu0 %v42, 127
  %v71 = vpop.permute.xlu0 %70
  %72 = vrot.lane.b32.xlu0 %v43, 127
  %v73 = vpop.permute.xlu0 %72
  %74 = vrot.lane.b32.xlu0 %v44, 127
  %v75 = vpop.permute.xlu0 %74
  %76 = vrot.lane.b32.xlu0 %v45, 127
  %v77 = vpop.permute.xlu0 %76
  %78 = vrot.lane.b32.xlu0 %v46, 127
  %v79 = vpop.permute.xlu0 %78
  %80 = vrot.lane.b32.xlu0 %v47, 127
  %v81 = vpop.permute.xlu0 %80
  %82 = vrot.lane.b32.xlu0 %v48, 127
  %v83 = vpop.permute.xlu0 %82
  %84 = vrot.lane.b32.xlu0 %v49, 127
  %v85 = vpop.permute.xlu0 %84
  %vm86 = vcmask 1039360
  %v87 = vsel %vm86, %v63, %v65
  %v88 = vsel %vm86, %v65, %v67
  %v89 = vsel %vm86, %v67, %v69
  %v90 = vsel %vm86, %v69, %v71
  %v91 = vsel %vm86, %v71, %v73
  %v92 = vsel %vm86, %v73, %v75
  %v93 = vsel %vm86, %v75, %v77
  %v94 = vsel %vm86, %v77, %v79
  %v95 = vsel %vm86, %v79, %v81
  %v96 = vsel %vm86, %v81, %v83
  %v97 = vsel %vm86, %v83, %v85
  %110 = vrot.lane.b32.xlu0 %v38, 126
  %v111 = vpop.permute.xlu0 %110
  %112 = vrot.lane.b32.xlu0 %v39, 126
  %v113 = vpop.permute.xlu0 %112
  %114 = vrot.lane.b32.xlu0 %v40, 126
  %v115 = vpop.permute.xlu0 %114
  %116 = vrot.lane.b32.xlu0 %v41, 126
  %v117 = vpop.permute.xlu0 %116
  %118 = vrot.lane.b32.xlu0 %v42, 126
  %v119 = vpop.permute.xlu0 %118
  %120 = vrot.lane.b32.xlu0 %v43, 126
  %v121 = vpop.permute.xlu0 %120
  %122 = vrot.lane.b32.xlu0 %v44, 126
  %v123 = vpop.permute.xlu0 %122
  %124 = vrot.lane.b32.xlu0 %v45, 126
  %v125 = vpop.permute.xlu0 %124
  %126 = vrot.lane.b32.xlu0 %v46, 126
  %v127 = vpop.permute.xlu0 %126
  %128 = vrot.lane.b32.xlu0 %v47, 126
  %v129 = vpop.permute.xlu0 %128
  %130 = vrot.lane.b32.xlu0 %v48, 126
  %v131 = vpop.permute.xlu0 %130
  %132 = vrot.lane.b32.xlu0 %v49, 126
  %v133 = vpop.permute.xlu0 %132
  %vm134 = vcmask 1031168
  %v135 = vsel %vm134, %v111, %v113
  %v136 = vsel %vm134, %v113, %v115
  %v137 = vsel %vm134, %v115, %v117
  %v138 = vsel %vm134, %v117, %v119
  %v139 = vsel %vm134, %v119, %v121
  %v140 = vsel %vm134, %v121, %v123
  %v141 = vsel %vm134, %v123, %v125
  %v142 = vsel %vm134, %v125, %v127
  %v143 = vsel %vm134, %v127, %v129
  %v144 = vsel %vm134, %v129, %v131
  %v145 = vsel %vm134, %v131, %v133
  %158 = vrot.lane.b32.xlu0 %v38, 104
  %v159 = vpop.permute.xlu0 %158
  %160 = vrot.lane.b32.xlu0 %v39, 104
  %v161 = vpop.permute.xlu0 %160
  %162 = vrot.lane.b32.xlu0 %v40, 104
  %v163 = vpop.permute.xlu0 %162
  %164 = vrot.lane.b32.xlu0 %v41, 104
  %v165 = vpop.permute.xlu0 %164
  %166 = vrot.lane.b32.xlu0 %v42, 104
  %v167 = vpop.permute.xlu0 %166
  %168 = vrot.lane.b32.xlu0 %v43, 104
  %v169 = vpop.permute.xlu0 %168
  %170 = vrot.lane.b32.xlu0 %v44, 104
  %v171 = vpop.permute.xlu0 %170
  %172 = vrot.lane.b32.xlu0 %v45, 104
  %v173 = vpop.permute.xlu0 %172
  %174 = vrot.lane.b32.xlu0 %v46, 104
  %v175 = vpop.permute.xlu0 %174
  %176 = vrot.lane.b32.xlu0 %v47, 104
  %v177 = vpop.permute.xlu0 %176
  %178 = vrot.lane.b32.xlu0 %v48, 104
  %v179 = vpop.permute.xlu0 %178
  %180 = vrot.lane.b32.xlu0 %v49, 104
  %v181 = vpop.permute.xlu0 %180
  %vm182 = vcmask 850944
  %v183 = vsel %vm182, %v159, %v161
  %v184 = vsel %vm182, %v161, %v163
  %v185 = vsel %vm182, %v163, %v165
  %v186 = vsel %vm182, %v165, %v167
  %v187 = vsel %vm182, %v167, %v169
  %v188 = vsel %vm182, %v169, %v171
  %v189 = vsel %vm182, %v171, %v173
  %v190 = vsel %vm182, %v173, %v175
  %v191 = vsel %vm182, %v175, %v177
  %v192 = vsel %vm182, %v177, %v179
  %v193 = vsel %vm182, %v179, %v181
  %206 = vrot.lane.b32.xlu0 %v38, 103
  %v207 = vpop.permute.xlu0 %206
  %208 = vrot.lane.b32.xlu0 %v39, 103
  %v209 = vpop.permute.xlu0 %208
  %210 = vrot.lane.b32.xlu0 %v40, 103
  %v211 = vpop.permute.xlu0 %210
  %212 = vrot.lane.b32.xlu0 %v41, 103
  %v213 = vpop.permute.xlu0 %212
  %214 = vrot.lane.b32.xlu0 %v42, 103
  %v215 = vpop.permute.xlu0 %214
  %216 = vrot.lane.b32.xlu0 %v43, 103
  %v217 = vpop.permute.xlu0 %216
  %218 = vrot.lane.b32.xlu0 %v44, 103
  %v219 = vpop.permute.xlu0 %218
  %220 = vrot.lane.b32.xlu0 %v45, 103
  %v221 = vpop.permute.xlu0 %220
  %222 = vrot.lane.b32.xlu0 %v46, 103
  %v223 = vpop.permute.xlu0 %222
  %224 = vrot.lane.b32.xlu0 %v47, 103
  %v225 = vpop.permute.xlu0 %224
  %226 = vrot.lane.b32.xlu0 %v48, 103
  %v227 = vpop.permute.xlu0 %226
  %228 = vrot.lane.b32.xlu0 %v49, 103
  %v229 = vpop.permute.xlu0 %228
  %vm230 = vcmask 842752
  %v231 = vsel %vm230, %v207, %v209
  %v232 = vsel %vm230, %v209, %v211
  %v233 = vsel %vm230, %v211, %v213
  %v234 = vsel %vm230, %v213, %v215
  %v235 = vsel %vm230, %v215, %v217
  %v236 = vsel %vm230, %v217, %v219
  %v237 = vsel %vm230, %v219, %v221
  %v238 = vsel %vm230, %v221, %v223
  %v239 = vsel %vm230, %v223, %v225
  %v240 = vsel %vm230, %v225, %v227
  %v241 = vsel %vm230, %v227, %v229
  %254 = vrot.lane.b32.xlu0 %v38, 102
  %v255 = vpop.permute.xlu0 %254
  %256 = vrot.lane.b32.xlu0 %v39, 102
  %v257 = vpop.permute.xlu0 %256
  %258 = vrot.lane.b32.xlu0 %v40, 102
  %v259 = vpop.permute.xlu0 %258
  %260 = vrot.lane.b32.xlu0 %v41, 102
  %v261 = vpop.permute.xlu0 %260
  %262 = vrot.lane.b32.xlu0 %v42, 102
  %v263 = vpop.permute.xlu0 %262
  %264 = vrot.lane.b32.xlu0 %v43, 102
  %v265 = vpop.permute.xlu0 %264
  %266 = vrot.lane.b32.xlu0 %v44, 102
  %v267 = vpop.permute.xlu0 %266
  %268 = vrot.lane.b32.xlu0 %v45, 102
  %v269 = vpop.permute.xlu0 %268
  %270 = vrot.lane.b32.xlu0 %v46, 102
  %v271 = vpop.permute.xlu0 %270
  %272 = vrot.lane.b32.xlu0 %v47, 102
  %v273 = vpop.permute.xlu0 %272
  %274 = vrot.lane.b32.xlu0 %v48, 102
  %v275 = vpop.permute.xlu0 %274
  %276 = vrot.lane.b32.xlu0 %v49, 102
  %v277 = vpop.permute.xlu0 %276
  %vm278 = vcmask 834560
  %v279 = vsel %vm278, %v255, %v257
  %v280 = vsel %vm278, %v257, %v259
  %v281 = vsel %vm278, %v259, %v261
  %v282 = vsel %vm278, %v261, %v263
  %v283 = vsel %vm278, %v263, %v265
  %v284 = vsel %vm278, %v265, %v267
  %v285 = vsel %vm278, %v267, %v269
  %v286 = vsel %vm278, %v269, %v271
  %v287 = vsel %vm278, %v271, %v273
  %v288 = vsel %vm278, %v273, %v275
  %v289 = vsel %vm278, %v275, %v277
  %302 = vrot.lane.b32.xlu0 %v38, 80
  %v303 = vpop.permute.xlu0 %302
  %304 = vrot.lane.b32.xlu0 %v39, 80
  %v305 = vpop.permute.xlu0 %304
  %306 = vrot.lane.b32.xlu0 %v40, 80
  %v307 = vpop.permute.xlu0 %306
  %308 = vrot.lane.b32.xlu0 %v41, 80
  %v309 = vpop.permute.xlu0 %308
  %310 = vrot.lane.b32.xlu0 %v42, 80
  %v311 = vpop.permute.xlu0 %310
  %312 = vrot.lane.b32.xlu0 %v43, 80
  %v313 = vpop.permute.xlu0 %312
  %314 = vrot.lane.b32.xlu0 %v44, 80
  %v315 = vpop.permute.xlu0 %314
  %316 = vrot.lane.b32.xlu0 %v45, 80
  %v317 = vpop.permute.xlu0 %316
  %318 = vrot.lane.b32.xlu0 %v46, 80
  %v319 = vpop.permute.xlu0 %318
  %320 = vrot.lane.b32.xlu0 %v47, 80
  %v321 = vpop.permute.xlu0 %320
  %322 = vrot.lane.b32.xlu0 %v48, 80
  %v323 = vpop.permute.xlu0 %322
  %324 = vrot.lane.b32.xlu0 %v49, 80
  %v325 = vpop.permute.xlu0 %324
  %vm326 = vcmask 654336
  %v327 = vsel %vm326, %v303, %v305
  %v328 = vsel %vm326, %v305, %v307
  %v329 = vsel %vm326, %v307, %v309
  %v330 = vsel %vm326, %v309, %v311
  %v331 = vsel %vm326, %v311, %v313
  %v332 = vsel %vm326, %v313, %v315
  %v333 = vsel %vm326, %v315, %v317
  %v334 = vsel %vm326, %v317, %v319
  %v335 = vsel %vm326, %v319, %v321
  %v336 = vsel %vm326, %v321, %v323
  %v337 = vsel %vm326, %v323, %v325
  %350 = vrot.lane.b32.xlu0 %v38, 79
  %v351 = vpop.permute.xlu0 %350
  %352 = vrot.lane.b32.xlu0 %v39, 79
  %v353 = vpop.permute.xlu0 %352
  %354 = vrot.lane.b32.xlu0 %v40, 79
  %v355 = vpop.permute.xlu0 %354
  %356 = vrot.lane.b32.xlu0 %v41, 79
  %v357 = vpop.permute.xlu0 %356
  %358 = vrot.lane.b32.xlu0 %v42, 79
  %v359 = vpop.permute.xlu0 %358
  %360 = vrot.lane.b32.xlu0 %v43, 79
  %v361 = vpop.permute.xlu0 %360
  %362 = vrot.lane.b32.xlu0 %v44, 79
  %v363 = vpop.permute.xlu0 %362
  %364 = vrot.lane.b32.xlu0 %v45, 79
  %v365 = vpop.permute.xlu0 %364
  %366 = vrot.lane.b32.xlu0 %v46, 79
  %v367 = vpop.permute.xlu0 %366
  %368 = vrot.lane.b32.xlu0 %v47, 79
  %v369 = vpop.permute.xlu0 %368
  %370 = vrot.lane.b32.xlu0 %v48, 79
  %v371 = vpop.permute.xlu0 %370
  %372 = vrot.lane.b32.xlu0 %v49, 79
  %v373 = vpop.permute.xlu0 %372
  %vm374 = vcmask 646144
  %v375 = vsel %vm374, %v351, %v353
  %v376 = vsel %vm374, %v353, %v355
  %v377 = vsel %vm374, %v355, %v357
  %v378 = vsel %vm374, %v357, %v359
  %v379 = vsel %vm374, %v359, %v361
  %v380 = vsel %vm374, %v361, %v363
  %v381 = vsel %vm374, %v363, %v365
  %v382 = vsel %vm374, %v365, %v367
  %v383 = vsel %vm374, %v367, %v369
  %v384 = vsel %vm374, %v369, %v371
  %v385 = vsel %vm374, %v371, %v373
  %398 = vrot.lane.b32.xlu0 %v38, 78
  %v399 = vpop.permute.xlu0 %398
  %400 = vrot.lane.b32.xlu0 %v39, 78
  %v401 = vpop.permute.xlu0 %400
  %402 = vrot.lane.b32.xlu0 %v40, 78
  %v403 = vpop.permute.xlu0 %402
  %404 = vrot.lane.b32.xlu0 %v41, 78
  %v405 = vpop.permute.xlu0 %404
  %406 = vrot.lane.b32.xlu0 %v42, 78
  %v407 = vpop.permute.xlu0 %406
  %408 = vrot.lane.b32.xlu0 %v43, 78
  %v409 = vpop.permute.xlu0 %408
  %410 = vrot.lane.b32.xlu0 %v44, 78
  %v411 = vpop.permute.xlu0 %410
  %412 = vrot.lane.b32.xlu0 %v45, 78
  %v413 = vpop.permute.xlu0 %412
  %414 = vrot.lane.b32.xlu0 %v46, 78
  %v415 = vpop.permute.xlu0 %414
  %416 = vrot.lane.b32.xlu0 %v47, 78
  %v417 = vpop.permute.xlu0 %416
  %418 = vrot.lane.b32.xlu0 %v48, 78
  %v419 = vpop.permute.xlu0 %418
  %420 = vrot.lane.b32.xlu0 %v49, 78
  %v421 = vpop.permute.xlu0 %420
  %vm422 = vcmask 637952
  %v423 = vsel %vm422, %v399, %v401
  %v424 = vsel %vm422, %v401, %v403
  %v425 = vsel %vm422, %v403, %v405
  %v426 = vsel %vm422, %v405, %v407
  %v427 = vsel %vm422, %v407, %v409
  %v428 = vsel %vm422, %v409, %v411
  %v429 = vsel %vm422, %v411, %v413
  %v430 = vsel %vm422, %v413, %v415
  %v431 = vsel %vm422, %v415, %v417
  %v432 = vsel %vm422, %v417, %v419
  %v433 = vsel %vm422, %v419, %v421
  %v446 = vld [vmem:[%s1] sm:$0xff]
  %v447 = vld [vmem:[%s2] sm:$0xff]
  %449 = vset.pattern.permute.xlu0 0
  %450 = vperm.xlu0 %449, %v447
  %v451 = vpop.permute.xlu0 %450
  %vm453 = vcmask 588800
  %v455 = vsel %vm453, %v446, 0
  %457 = vmatpush.msra.mxu0 0.0
  %458 = vmatpush.msra.mxu0 0.0
  %459 = vmatpush.msra.mxu0 0.0
  %460 = vmatpush.msra.mxu0 0.0
  %461 = vmatpush.msra.mxu0 0.0
  %462 = vmatpush.msra.mxu0 0.0
  %463 = vmatpush.msra.mxu0 0.0
  %464 = vmatpush.msra.mxu0 %v423
  %465 = vmatpush.msra.mxu0 %v375
  %466 = vmatpush.msra.mxu0 %v327
  %467 = vmatpush.msra.mxu0 %v279
  %468 = vmatpush.msra.mxu0 %v231
  %469 = vmatpush.msra.mxu0 %v183
  %470 = vmatpush.msra.mxu0 %v135
  %471 = vmatpush.msra.mxu0 %v87
  %472 = vmatpush.msra.mxu0 %v38
  %473 = vmatmul.f32.gmra.mxu0 %v455
  %v474 = vpop.f32.mrf.mxu0
  %v475 = vadd.f32 %v451, %v474
  %476 = vdwg.mxu0
  %477 = vmatpush.msra.mxu0 0.0
  %478 = vmatpush.msra.mxu0 0.0
  %479 = vmatpush.msra.mxu0 0.0
  %480 = vmatpush.msra.mxu0 0.0
  %481 = vmatpush.msra.mxu0 0.0
  %482 = vmatpush.msra.mxu0 0.0
  %483 = vmatpush.msra.mxu0 0.0
  %484 = vmatpush.msra.mxu0 %v424
  %485 = vmatpush.msra.mxu0 %v376
  %486 = vmatpush.msra.mxu0 %v328
  %487 = vmatpush.msra.mxu0 %v280
  %488 = vmatpush.msra.mxu0 %v232
  %489 = vmatpush.msra.mxu0 %v184
  %490 = vmatpush.msra.mxu0 %v136
  %491 = vmatpush.msra.mxu0 %v88
  %492 = vmatpush.msra.mxu0 %v39
  %493 = vmatmul.f32.gmra.mxu0 %v455
  %v494 = vpop.f32.mrf.mxu0
  %v495 = vadd.f32 %v451, %v494
  %496 = vdwg.mxu0
  %497 = vmatpush.msra.mxu0 0.0
  %498 = vmatpush.msra.mxu0 0.0
  %499 = vmatpush.msra.mxu0 0.0
  %500 = vmatpush.msra.mxu0 0.0
  %501 = vmatpush.msra.mxu0 0.0
  %502 = vmatpush.msra.mxu0 0.0
  %503 = vmatpush.msra.mxu0 0.0
  %504 = vmatpush.msra.mxu0 %v425
  %505 = vmatpush.msra.mxu0 %v377
  %506 = vmatpush.msra.mxu0 %v329
  %507 = vmatpush.msra.mxu0 %v281
  %508 = vmatpush.msra.mxu0 %v233
  %509 = vmatpush.msra.mxu0 %v185
  %510 = vmatpush.msra.mxu0 %v137
  %511 = vmatpush.msra.mxu0 %v89
  %512 = vmatpush.msra.mxu0 %v40
  %513 = vmatmul.f32.gmra.mxu0 %v455
  %v514 = vpop.f32.mrf.mxu0
  %v515 = vadd.f32 %v451, %v514
  %516 = vdwg.mxu0
  %517 = vmatpush.msra.mxu0 0.0
  %518 = vmatpush.msra.mxu0 0.0
  %519 = vmatpush.msra.mxu0 0.0
  %520 = vmatpush.msra.mxu0 0.0
  %521 = vmatpush.msra.mxu0 0.0
  %522 = vmatpush.msra.mxu0 0.0
  %523 = vmatpush.msra.mxu0 0.0
  %524 = vmatpush.msra.mxu0 %v426
  %525 = vmatpush.msra.mxu0 %v378
  %526 = vmatpush.msra.mxu0 %v330
  %527 = vmatpush.msra.mxu0 %v282
  %528 = vmatpush.msra.mxu0 %v234
  %529 = vmatpush.msra.mxu0 %v186
  %530 = vmatpush.msra.mxu0 %v138
  %531 = vmatpush.msra.mxu0 %v90
  %532 = vmatpush.msra.mxu0 %v41
  %533 = vmatmul.f32.gmra.mxu0 %v455
  %v534 = vpop.f32.mrf.mxu0
  %v535 = vadd.f32 %v451, %v534
  %536 = vdwg.mxu0
  %537 = vmatpush.msra.mxu0 0.0
  %538 = vmatpush.msra.mxu0 0.0
  %539 = vmatpush.msra.mxu0 0.0
  %540 = vmatpush.msra.mxu0 0.0
  %541 = vmatpush.msra.mxu0 0.0
  %542 = vmatpush.msra.mxu0 0.0
  %543 = vmatpush.msra.mxu0 0.0
  %544 = vmatpush.msra.mxu0 %v427
  %545 = vmatpush.msra.mxu0 %v379
  %546 = vmatpush.msra.mxu0 %v331
  %547 = vmatpush.msra.mxu0 %v283
  %548 = vmatpush.msra.mxu0 %v235
  %549 = vmatpush.msra.mxu0 %v187
  %550 = vmatpush.msra.mxu0 %v139
  %551 = vmatpush.msra.mxu0 %v91
  %552 = vmatpush.msra.mxu0 %v42
  %553 = vmatmul.f32.gmra.mxu0 %v455
  %v554 = vpop.f32.mrf.mxu0
  %v555 = vadd.f32 %v451, %v554
  %556 = vdwg.mxu0
  %557 = vmatpush.msra.mxu0 0.0
  %558 = vmatpush.msra.mxu0 0.0
  %559 = vmatpush.msra.mxu0 0.0
  %560 = vmatpush.msra.mxu0 0.0
  %561 = vmatpush.msra.mxu0 0.0
  %562 = vmatpush.msra.mxu0 0.0
  %563 = vmatpush.msra.mxu0 0.0
  %564 = vmatpush.msra.mxu0 %v428
  %565 = vmatpush.msra.mxu0 %v380
  %566 = vmatpush.msra.mxu0 %v332
  %567 = vmatpush.msra.mxu0 %v284
  %568 = vmatpush.msra.mxu0 %v236
  %569 = vmatpush.msra.mxu0 %v188
  %570 = vmatpush.msra.mxu0 %v140
  %571 = vmatpush.msra.mxu0 %v92
  %572 = vmatpush.msra.mxu0 %v43
  %573 = vmatmul.f32.gmra.mxu0 %v455
  %v574 = vpop.f32.mrf.mxu0
  %v575 = vadd.f32 %v451, %v574
  %576 = vdwg.mxu0
  %577 = vmatpush.msra.mxu0 0.0
  %578 = vmatpush.msra.mxu0 0.0
  %579 = vmatpush.msra.mxu0 0.0
  %580 = vmatpush.msra.mxu0 0.0
  %581 = vmatpush.msra.mxu0 0.0
  %582 = vmatpush.msra.mxu0 0.0
  %583 = vmatpush.msra.mxu0 0.0
  %584 = vmatpush.msra.mxu0 %v429
  %585 = vmatpush.msra.mxu0 %v381
  %586 = vmatpush.msra.mxu0 %v333
  %587 = vmatpush.msra.mxu0 %v285
  %588 = vmatpush.msra.mxu0 %v237
  %589 = vmatpush.msra.mxu0 %v189
  %590 = vmatpush.msra.mxu0 %v141
  %591 = vmatpush.msra.mxu0 %v93
  %592 = vmatpush.msra.mxu0 %v44
  %593 = vmatmul.f32.gmra.mxu0 %v455
  %v594 = vpop.f32.mrf.mxu0
  %v595 = vadd.f32 %v451, %v594
  %596 = vdwg.mxu0
  %597 = vmatpush.msra.mxu0 0.0
  %598 = vmatpush.msra.mxu0 0.0
  %599 = vmatpush.msra.mxu0 0.0
  %600 = vmatpush.msra.mxu0 0.0
  %601 = vmatpush.msra.mxu0 0.0
  %602 = vmatpush.msra.mxu0 0.0
  %603 = vmatpush.msra.mxu0 0.0
  %604 = vmatpush.msra.mxu0 %v430
  %605 = vmatpush.msra.mxu0 %v382
  %606 = vmatpush.msra.mxu0 %v334
  %607 = vmatpush.msra.mxu0 %v286
  %608 = vmatpush.msra.mxu0 %v238
  %609 = vmatpush.msra.mxu0 %v190
  %610 = vmatpush.msra.mxu0 %v142
  %611 = vmatpush.msra.mxu0 %v94
  %612 = vmatpush.msra.mxu0 %v45
  %613 = vmatmul.f32.gmra.mxu0 %v455
  %v614 = vpop.f32.mrf.mxu0
  %v615 = vadd.f32 %v451, %v614
  %616 = vdwg.mxu0
  %617 = vmatpush.msra.mxu0 0.0
  %618 = vmatpush.msra.mxu0 0.0
  %619 = vmatpush.msra.mxu0 0.0
  %620 = vmatpush.msra.mxu0 0.0
  %621 = vmatpush.msra.mxu0 0.0
  %622 = vmatpush.msra.mxu0 0.0
  %623 = vmatpush.msra.mxu0 0.0
  %624 = vmatpush.msra.mxu0 %v431
  %625 = vmatpush.msra.mxu0 %v383
  %626 = vmatpush.msra.mxu0 %v335
  %627 = vmatpush.msra.mxu0 %v287
  %628 = vmatpush.msra.mxu0 %v239
  %629 = vmatpush.msra.mxu0 %v191
  %630 = vmatpush.msra.mxu0 %v143
  %631 = vmatpush.msra.mxu0 %v95
  %632 = vmatpush.msra.mxu0 %v46
  %633 = vmatmul.f32.gmra.mxu0 %v455
  %v634 = vpop.f32.mrf.mxu0
  %v635 = vadd.f32 %v451, %v634
  %636 = vdwg.mxu0
  %637 = vmatpush.msra.mxu0 0.0
  %638 = vmatpush.msra.mxu0 0.0
  %639 = vmatpush.msra.mxu0 0.0
  %640 = vmatpush.msra.mxu0 0.0
  %641 = vmatpush.msra.mxu0 0.0
  %642 = vmatpush.msra.mxu0 0.0
  %643 = vmatpush.msra.mxu0 0.0
  %644 = vmatpush.msra.mxu0 %v432
  %645 = vmatpush.msra.mxu0 %v384
  %646 = vmatpush.msra.mxu0 %v336
  %647 = vmatpush.msra.mxu0 %v288
  %648 = vmatpush.msra.mxu0 %v240
  %649 = vmatpush.msra.mxu0 %v192
  %650 = vmatpush.msra.mxu0 %v144
  %651 = vmatpush.msra.mxu0 %v96
  %652 = vmatpush.msra.mxu0 %v47
  %653 = vmatmul.f32.gmra.mxu0 %v455
  %v654 = vpop.f32.mrf.mxu0
  %v655 = vadd.f32 %v451, %v654
  %656 = vdwg.mxu0
  %657 = vmatpush.msra.mxu0 0.0
  %658 = vmatpush.msra.mxu0 0.0
  %659 = vmatpush.msra.mxu0 0.0
  %660 = vmatpush.msra.mxu0 0.0
  %661 = vmatpush.msra.mxu0 0.0
  %662 = vmatpush.msra.mxu0 0.0
  %663 = vmatpush.msra.mxu0 0.0
  %664 = vmatpush.msra.mxu0 %v433
  %665 = vmatpush.msra.mxu0 %v385
  %666 = vmatpush.msra.mxu0 %v337
  %667 = vmatpush.msra.mxu0 %v289
  %668 = vmatpush.msra.mxu0 %v241
  %669 = vmatpush.msra.mxu0 %v193
  %670 = vmatpush.msra.mxu0 %v145
  %671 = vmatpush.msra.mxu0 %v97
  %672 = vmatpush.msra.mxu0 %v48
  %673 = vmatmul.f32.gmra.mxu0 %v455
  %v674 = vpop.f32.mrf.mxu0
  %v675 = vadd.f32 %v451, %v674
  %676 = vdwg.mxu0
  %677 = vmatpush.msra.mxu0 0.0
  %678 = vmatpush.msra.mxu0 0.0
  %679 = vmatpush.msra.mxu0 0.0
  %680 = vmatpush.msra.mxu0 0.0
  %681 = vmatpush.msra.mxu0 0.0
  %682 = vmatpush.msra.mxu0 0.0
  %683 = vmatpush.msra.mxu0 0.0
  %684 = vmatpush.msra.mxu0 %v421
  %685 = vmatpush.msra.mxu0 %v373
  %686 = vmatpush.msra.mxu0 %v325
  %687 = vmatpush.msra.mxu0 %v277
  %688 = vmatpush.msra.mxu0 %v229
  %689 = vmatpush.msra.mxu0 %v181
  %690 = vmatpush.msra.mxu0 %v133
  %691 = vmatpush.msra.mxu0 %v85
  %692 = vmatpush.msra.mxu0 %v49
  %693 = vmatmul.f32.gmra.mxu0 %v455
  %v694 = vpop.f32.mrf.mxu0
  %v695 = vadd.f32 %v451, %v694
  %696 = vdwg.mxu0
  %v697 = vmax.f32 %v475, 0.0
  %v698 = vmax.f32 %v495, 0.0
  %v699 = vmax.f32 %v515, 0.0
  %v700 = vmax.f32 %v535, 0.0
  %v701 = vmax.f32 %v555, 0.0
  %v702 = vmax.f32 %v575, 0.0
  %v703 = vmax.f32 %v595, 0.0
  %v704 = vmax.f32 %v615, 0.0
  %v705 = vmax.f32 %v635, 0.0
  %v706 = vmax.f32 %v655, 0.0
  %v707 = vmax.f32 %v675, 0.0
  %v708 = vmax.f32 %v695, 0.0
  %721 = vrot.lane.b32.xlu0 %v697, 127
  %v722 = vpop.permute.xlu0 %721
  %723 = vrot.lane.b32.xlu0 %v698, 127
  %v724 = vpop.permute.xlu0 %723
  %725 = vrot.lane.b32.xlu0 %v699, 127
  %v726 = vpop.permute.xlu0 %725
  %727 = vrot.lane.b32.xlu0 %v700, 127
  %v728 = vpop.permute.xlu0 %727
  %729 = vrot.lane.b32.xlu0 %v701, 127
  %v730 = vpop.permute.xlu0 %729
  %731 = vrot.lane.b32.xlu0 %v702, 127
  %v732 = vpop.permute.xlu0 %731
  %733 = vrot.lane.b32.xlu0 %v703, 127
  %v734 = vpop.permute.xlu0 %733
  %735 = vrot.lane.b32.xlu0 %v704, 127
  %v736 = vpop.permute.xlu0 %735
  %737 = vrot.lane.b32.xlu0 %v705, 127
  %v738 = vpop.permute.xlu0 %737
  %739 = vrot.lane.b32.xlu0 %v706, 127
  %v740 = vpop.permute.xlu0 %739
  %741 = vrot.lane.b32.xlu0 %v707, 127
  %v742 = vpop.permute.xlu0 %741
  %743 = vrot.lane.b32.xlu0 %v708, 127
  %v744 = vpop.permute.xlu0 %743
  %v745 = vsel %vm86, %v722, %v724
  %v746 = vsel %vm86, %v724, %v726
  %v747 = vsel %vm86, %v726, %v728
  %v748 = vsel %vm86, %v728, %v730
  %v749 = vsel %vm86, %v730, %v732
  %v750 = vsel %vm86, %v732, %v734
  %v751 = vsel %vm86, %v734, %v736
  %v752 = vsel %vm86, %v736, %v738
  %v753 = vsel %vm86, %v738, %v740
  %v754 = vsel %vm86, %v740, %v742
  %v755 = vsel %vm86, %v742, %v744
  %768 = vrot.lane.b32.xlu0 %v697, 126
  %v769 = vpop.permute.xlu0 %768
  %770 = vrot.lane.b32.xlu0 %v698, 126
  %v771 = vpop.permute.xlu0 %770
  %772 = vrot.lane.b32.xlu0 %v699, 126
  %v773 = vpop.permute.xlu0 %772
  %774 = vrot.lane.b32.xlu0 %v700, 126
  %v775 = vpop.permute.xlu0 %774
  %776 = vrot.lane.b32.xlu0 %v701, 126
  %v777 = vpop.permute.xlu0 %776
  %778 = vrot.lane.b32.xlu0 %v702, 126
  %v779 = vpop.permute.xlu0 %778
  %780 = vrot.lane.b32.xlu0 %v703, 126
  %v781 = vpop.permute.xlu0 %780
  %782 = vrot.lane.b32.xlu0 %v704, 126
  %v783 = vpop.permute.xlu0 %782
  %784 = vrot.lane.b32.xlu0 %v705, 126
  %v785 = vpop.permute.xlu0 %784
  %786 = vrot.lane.b32.xlu0 %v706, 126
  %v787 = vpop.permute.xlu0 %786
  %788 = vrot.lane.b32.xlu0 %v707, 126
  %v789 = vpop.permute.xlu0 %788
  %790 = vrot.lane.b32.xlu0 %v708, 126
  %v791 = vpop.permute.xlu0 %790
  %v792 = vsel %vm134, %v769, %v771
  %v793 = vsel %vm134, %v771, %v773
  %v794 = vsel %vm134, %v773, %v775
  %v795 = vsel %vm134, %v775, %v777
  %v796 = vsel %vm134, %v777, %v779
  %v797 = vsel %vm134, %v779, %v781
  %v798 = vsel %vm134, %v781, %v783
  %v799 = vsel %vm134, %v783, %v785
  %v800 = vsel %vm134, %v785, %v787
  %v801 = vsel %vm134, %v787, %v789
  %v802 = vsel %vm134, %v789, %v791
  %815 = vrot.lane.b32.xlu0 %v697, 104
  %v816 = vpop.permute.xlu0 %815
  %817 = vrot.lane.b32.xlu0 %v698, 104
  %v818 = vpop.permute.xlu0 %817
  %819 = vrot.lane.b32.xlu0 %v699, 104
  %v820 = vpop.permute.xlu0 %819
  %821 = vrot.lane.b32.xlu0 %v700, 104
  %v822 = vpop.permute.xlu0 %821
  %823 = vrot.lane.b32.xlu0 %v701, 104
  %v824 = vpop.permute.xlu0 %823
  %825 = vrot.lane.b32.xlu0 %v702, 104
  %v826 = vpop.permute.xlu0 %825
  %827 = vrot.lane.b32.xlu0 %v703, 104
  %v828 = vpop.permute.xlu0 %827
  %829 = vrot.lane.b32.xlu0 %v704, 104
  %v830 = vpop.permute.xlu0 %829
  %831 = vrot.lane.b32.xlu0 %v705, 104
  %v832 = vpop.permute.xlu0 %831
  %833 = vrot.lane.b32.xlu0 %v706, 104
  %v834 = vpop.permute.xlu0 %833
  %835 = vrot.lane.b32.xlu0 %v707, 104
  %v836 = vpop.permute.xlu0 %835
  %837 = vrot.lane.b32.xlu0 %v708, 104
  %v838 = vpop.permute.xlu0 %837
  %v839 = vsel %vm182, %v816, %v818
  %v840 = vsel %vm182, %v818, %v820
  %v841 = vsel %vm182, %v820, %v822
  %v842 = vsel %vm182, %v822, %v824
  %v843 = vsel %vm182, %v824, %v826
  %v844 = vsel %vm182, %v826, %v828
  %v845 = vsel %vm182, %v828, %v830
  %v846 = vsel %vm182, %v830, %v832
  %v847 = vsel %vm182, %v832, %v834
  %v848 = vsel %vm182, %v834, %v836
  %v849 = vsel %vm182, %v836, %v838
  %862 = vrot.lane.b32.xlu0 %v697, 103
  %v863 = vpop.permute.xlu0 %862
  %864 = vrot.lane.b32.xlu0 %v698, 103
  %v865 = vpop.permute.xlu0 %864
  %866 = vrot.lane.b32.xlu0 %v699, 103
  %v867 = vpop.permute.xlu0 %866
  %868 = vrot.lane.b32.xlu0 %v700, 103
  %v869 = vpop.permute.xlu0 %868
  %870 = vrot.lane.b32.xlu0 %v701, 103
  %v871 = vpop.permute.xlu0 %870
  %872 = vrot.lane.b32.xlu0 %v702, 103
  %v873 = vpop.permute.xlu0 %872
  %874 = vrot.lane.b32.xlu0 %v703, 103
  %v875 = vpop.permute.xlu0 %874
  %876 = vrot.lane.b32.xlu0 %v704, 103
  %v877 = vpop.permute.xlu0 %876
  %878 = vrot.lane.b32.xlu0 %v705, 103
  %v879 = vpop.permute.xlu0 %878
  %880 = vrot.lane.b32.xlu0 %v706, 103
  %v881 = vpop.permute.xlu0 %880
  %882 = vrot.lane.b32.xlu0 %v707, 103
  %v883 = vpop.permute.xlu0 %882
  %884 = vrot.lane.b32.xlu0 %v708, 103
  %v885 = vpop.permute.xlu0 %884
  %v886 = vsel %vm230, %v863, %v865
  %v887 = vsel %vm230, %v865, %v867
  %v888 = vsel %vm230, %v867, %v869
  %v889 = vsel %vm230, %v869, %v871
  %v890 = vsel %vm230, %v871, %v873
  %v891 = vsel %vm230, %v873, %v875
  %v892 = vsel %vm230, %v875, %v877
  %v893 = vsel %vm230, %v877, %v879
  %v894 = vsel %vm230, %v879, %v881
  %v895 = vsel %vm230, %v881, %v883
  %v896 = vsel %vm230, %v883, %v885
  %909 = vrot.lane.b32.xlu0 %v697, 102
  %v910 = vpop.permute.xlu0 %909
  %911 = vrot.lane.b32.xlu0 %v698, 102
  %v912 = vpop.permute.xlu0 %911
  %913 = vrot.lane.b32.xlu0 %v699, 102
  %v914 = vpop.permute.xlu0 %913
  %915 = vrot.lane.b32.xlu0 %v700, 102
  %v916 = vpop.permute.xlu0 %915
  %917 = vrot.lane.b32.xlu0 %v701, 102
  %v918 = vpop.permute.xlu0 %917
  %919 = vrot.lane.b32.xlu0 %v702, 102
  %v920 = vpop.permute.xlu0 %919
  %921 = vrot.lane.b32.xlu0 %v703, 102
  %v922 = vpop.permute.xlu0 %921
  %923 = vrot.lane.b32.xlu0 %v704, 102
  %v924 = vpop.permute.xlu0 %923
  %925 = vrot.lane.b32.xlu0 %v705, 102
  %v926 = vpop.permute.xlu0 %925
  %927 = vrot.lane.b32.xlu0 %v706, 102
  %v928 = vpop.permute.xlu0 %927
  %929 = vrot.lane.b32.xlu0 %v707, 102
  %v930 = vpop.permute.xlu0 %929
  %931 = vrot.lane.b32.xlu0 %v708, 102
  %v932 = vpop.permute.xlu0 %931
  %v933 = vsel %vm278, %v910, %v912
  %v934 = vsel %vm278, %v912, %v914
  %v935 = vsel %vm278, %v914, %v916
  %v936 = vsel %vm278, %v916, %v918
  %v937 = vsel %vm278, %v918, %v920
  %v938 = vsel %vm278, %v920, %v922
  %v939 = vsel %vm278, %v922, %v924
  %v940 = vsel %vm278, %v924, %v926
  %v941 = vsel %vm278, %v926, %v928
  %v942 = vsel %vm278, %v928, %v930
  %v943 = vsel %vm278, %v930, %v932
  %956 = vrot.lane.b32.xlu0 %v697, 80
  %v957 = vpop.permute.xlu0 %956
  %958 = vrot.lane.b32.xlu0 %v698, 80
  %v959 = vpop.permute.xlu0 %958
  %960 = vrot.lane.b32.xlu0 %v699, 80
  %v961 = vpop.permute.xlu0 %960
  %962 = vrot.lane.b32.xlu0 %v700, 80
  %v963 = vpop.permute.xlu0 %962
  %964 = vrot.lane.b32.xlu0 %v701, 80
  %v965 = vpop.permute.xlu0 %964
  %966 = vrot.lane.b32.xlu0 %v702, 80
  %v967 = vpop.permute.xlu0 %966
  %968 = vrot.lane.b32.xlu0 %v703, 80
  %v969 = vpop.permute.xlu0 %968
  %970 = vrot.lane.b32.xlu0 %v704, 80
  %v971 = vpop.permute.xlu0 %970
  %972 = vrot.lane.b32.xlu0 %v705, 80
  %v973 = vpop.permute.xlu0 %972
  %974 = vrot.lane.b32.xlu0 %v706, 80
  %v975 = vpop.permute.xlu0 %974
  %976 = vrot.lane.b32.xlu0 %v707, 80
  %v977 = vpop.permute.xlu0 %976
  %978 = vrot.lane.b32.xlu0 %v708, 80
  %v979 = vpop.permute.xlu0 %978
  %v980 = vsel %vm326, %v957, %v959
  %v981 = vsel %vm326, %v959, %v961
  %v982 = vsel %vm326, %v961, %v963
  %v983 = vsel %vm326, %v963, %v965
  %v984 = vsel %vm326, %v965, %v967
  %v985 = vsel %vm326, %v967, %v969
  %v986 = vsel %vm326, %v969, %v971
  %v987 = vsel %vm326, %v971, %v973
  %v988 = vsel %vm326, %v973, %v975
  %v989 = vsel %vm326, %v975, %v977
  %v990 = vsel %vm326, %v977, %v979
  %1003 = vrot.lane.b32.xlu0 %v697, 79
  %v1004 = vpop.permute.xlu0 %1003
  %1005 = vrot.lane.b32.xlu0 %v698, 79
  %v1006 = vpop.permute.xlu0 %1005
  %1007 = vrot.lane.b32.xlu0 %v699, 79
  %v1008 = vpop.permute.xlu0 %1007
  %1009 = vrot.lane.b32.xlu0 %v700, 79
  %v1010 = vpop.permute.xlu0 %1009
  %1011 = vrot.lane.b32.xlu0 %v701, 79
  %v1012 = vpop.permute.xlu0 %1011
  %1013 = vrot.lane.b32.xlu0 %v702, 79
  %v1014 = vpop.permute.xlu0 %1013
  %1015 = vrot.lane.b32.xlu0 %v703, 79
  %v1016 = vpop.permute.xlu0 %1015
  %1017 = vrot.lane.b32.xlu0 %v704, 79
  %v1018 = vpop.permute.xlu0 %1017
  %1019 = vrot.lane.b32.xlu0 %v705, 79
  %v1020 = vpop.permute.xlu0 %1019
  %1021 = vrot.lane.b32.xlu0 %v706, 79
  %v1022 = vpop.permute.xlu0 %1021
  %1023 = vrot.lane.b32.xlu0 %v707, 79
  %v1024 = vpop.permute.xlu0 %1023
  %1025 = vrot.lane.b32.xlu0 %v708, 79
  %v1026 = vpop.permute.xlu0 %1025
  %v1027 = vsel %vm374, %v1004, %v1006
  %v1028 = vsel %vm374, %v1006, %v1008
  %v1029 = vsel %vm374, %v1008, %v1010
  %v1030 = vsel %vm374, %v1010, %v1012
  %v1031 = vsel %vm374, %v1012, %v1014
  %v1032 = vsel %vm374, %v1014, %v1016
  %v1033 = vsel %vm374, %v1016, %v1018
  %v1034 = vsel %vm374, %v1018, %v1020
  %v1035 = vsel %vm374, %v1020, %v1022
  %v1036 = vsel %vm374, %v1022, %v1024
  %v1037 = vsel %vm374, %v1024, %v1026
  %1050 = vrot.lane.b32.xlu0 %v697, 78
  %v1051 = vpop.permute.xlu0 %1050
  %1052 = vrot.lane.b32.xlu0 %v698, 78
  %v1053 = vpop.permute.xlu0 %1052
  %1054 = vrot.lane.b32.xlu0 %v699, 78
  %v1055 = vpop.permute.xlu0 %1054
  %1056 = vrot.lane.b32.xlu0 %v700, 78
  %v1057 = vpop.permute.xlu0 %1056
  %1058 = vrot.lane.b32.xlu0 %v701, 78
  %v1059 = vpop.permute.xlu0 %1058
  %1060 = vrot.lane.b32.xlu0 %v702, 78
  %v1061 = vpop.permute.xlu0 %1060
  %1062 = vrot.lane.b32.xlu0 %v703, 78
  %v1063 = vpop.permute.xlu0 %1062
  %1064 = vrot.lane.b32.xlu0 %v704, 78
  %v1065 = vpop.permute.xlu0 %1064
  %1066 = vrot.lane.b32.xlu0 %v705, 78
  %v1067 = vpop.permute.xlu0 %1066
  %1068 = vrot.lane.b32.xlu0 %v706, 78
  %v1069 = vpop.permute.xlu0 %1068
  %1070 = vrot.lane.b32.xlu0 %v707, 78
  %v1071 = vpop.permute.xlu0 %1070
  %1072 = vrot.lane.b32.xlu0 %v708, 78
  %v1073 = vpop.permute.xlu0 %1072
  %v1074 = vsel %vm422, %v1051, %v1053
  %v1075 = vsel %vm422, %v1053, %v1055
  %v1076 = vsel %vm422, %v1055, %v1057
  %v1077 = vsel %vm422, %v1057, %v1059
  %v1078 = vsel %vm422, %v1059, %v1061
  %v1079 = vsel %vm422, %v1061, %v1063
  %v1080 = vsel %vm422, %v1063, %v1065
  %v1081 = vsel %vm422, %v1065, %v1067
  %v1082 = vsel %vm422, %v1067, %v1069
  %v1083 = vsel %vm422, %v1069, %v1071
  %v1084 = vsel %vm422, %v1071, %v1073
  %v1097 = vld [vmem:[%s3] sm:$0xff]
  %v1098 = vld [vmem:[%s4] sm:$0xff]
  %1100 = vset.pattern.permute.xlu0 0
  %1101 = vperm.xlu0 %1100, %v1098
  %v1102 = vpop.permute.xlu0 %1101
  %v1105 = vsel %vm453, %v1097, 0
  %1107 = vmatpush.msra.mxu0 0.0
  %1108 = vmatpush.msra.mxu0 0.0
  %1109 = vmatpush.msra.mxu0 0.0
  %1110 = vmatpush.msra.mxu0 0.0
  %1111 = vmatpush.msra.mxu0 0.0
  %1112 = vmatpush.msra.mxu0 0.0
  %1113 = vmatpush.msra.mxu0 0.0
  %1114 = vmatpush.msra.mxu0 %v1074
  %1115 = vmatpush.msra.mxu0 %v1027
  %1116 = vmatpush.msra.mxu0 %v980
  %1117 = vmatpush.msra.mxu0 %v933
  %1118 = vmatpush.msra.mxu0 %v886
  %1119 = vmatpush.msra.mxu0 %v839
  %1120 = vmatpush.msra.mxu0 %v792
  %1121 = vmatpush.msra.mxu0 %v745
  %1122 = vmatpush.msra.mxu0 %v697
  %1123 = vmatmul.f32.gmra.mxu0 %v1105
  %v1124 = vpop.f32.mrf.mxu0
  %v1125 = vadd.f32 %v1102, %v1124
  %1126 = vdwg.mxu0
  %1127 = vmatpush.msra.mxu0 0.0
  %1128 = vmatpush.msra.mxu0 0.0
  %1129 = vmatpush.msra.mxu0 0.0
  %1130 = vmatpush.msra.mxu0 0.0
  %1131 = vmatpush.msra.mxu0 0.0
  %1132 = vmatpush.msra.mxu0 0.0
  %1133 = vmatpush.msra.mxu0 0.0
  %1134 = vmatpush.msra.mxu0 %v1075
  %1135 = vmatpush.msra.mxu0 %v1028
  %1136 = vmatpush.msra.mxu0 %v981
  %1137 = vmatpush.msra.mxu0 %v934
  %1138 = vmatpush.msra.mxu0 %v887
  %1139 = vmatpush.msra.mxu0 %v840
  %1140 = vmatpush.msra.mxu0 %v793
  %1141 = vmatpush.msra.mxu0 %v746
  %1142 = vmatpush.msra.mxu0 %v698
  %1143 = vmatmul.f32.gmra.mxu0 %v1105
  %v1144 = vpop.f32.mrf.mxu0
  %v1145 = vadd.f32 %v1102, %v1144
  %1146 = vdwg.mxu0
  %1147 = vmatpush.msra.mxu0 0.0
  %1148 = vmatpush.msra.mxu0 0.0
  %1149 = vmatpush.msra.mxu0 0.0
  %1150 = vmatpush.msra.mxu0 0.0
  %1151 = vmatpush.msra.mxu0 0.0
  %1152 = vmatpush.msra.mxu0 0.0
  %1153 = vmatpush.msra.mxu0 0.0
  %1154 = vmatpush.msra.mxu0 %v1076
  %1155 = vmatpush.msra.mxu0 %v1029
  %1156 = vmatpush.msra.mxu0 %v982
  %1157 = vmatpush.msra.mxu0 %v935
  %1158 = vmatpush.msra.mxu0 %v888
  %1159 = vmatpush.msra.mxu0 %v841
  %1160 = vmatpush.msra.mxu0 %v794
  %1161 = vmatpush.msra.mxu0 %v747
  %1162 = vmatpush.msra.mxu0 %v699
  %1163 = vmatmul.f32.gmra.mxu0 %v1105
  %v1164 = vpop.f32.mrf.mxu0
  %v1165 = vadd.f32 %v1102, %v1164
  %1166 = vdwg.mxu0
  %1167 = vmatpush.msra.mxu0 0.0
  %1168 = vmatpush.msra.mxu0 0.0
  %1169 = vmatpush.msra.mxu0 0.0
  %1170 = vmatpush.msra.mxu0 0.0
  %1171 = vmatpush.msra.mxu0 0.0
  %1172 = vmatpush.msra.mxu0 0.0
  %1173 = vmatpush.msra.mxu0 0.0
  %1174 = vmatpush.msra.mxu0 %v1077
  %1175 = vmatpush.msra.mxu0 %v1030
  %1176 = vmatpush.msra.mxu0 %v983
  %1177 = vmatpush.msra.mxu0 %v936
  %1178 = vmatpush.msra.mxu0 %v889
  %1179 = vmatpush.msra.mxu0 %v842
  %1180 = vmatpush.msra.mxu0 %v795
  %1181 = vmatpush.msra.mxu0 %v748
  %1182 = vmatpush.msra.mxu0 %v700
  %1183 = vmatmul.f32.gmra.mxu0 %v1105
  %v1184 = vpop.f32.mrf.mxu0
  %v1185 = vadd.f32 %v1102, %v1184
  %1186 = vdwg.mxu0
  %1187 = vmatpush.msra.mxu0 0.0
  %1188 = vmatpush.msra.mxu0 0.0
  %1189 = vmatpush.msra.mxu0 0.0
  %1190 = vmatpush.msra.mxu0 0.0
  %1191 = vmatpush.msra.mxu0 0.0
  %1192 = vmatpush.msra.mxu0 0.0
  %1193 = vmatpush.msra.mxu0 0.0
  %1194 = vmatpush.msra.mxu0 %v1078
  %1195 = vmatpush.msra.mxu0 %v1031
  %1196 = vmatpush.msra.mxu0 %v984
  %1197 = vmatpush.msra.mxu0 %v937
  %1198 = vmatpush.msra.mxu0 %v890
  %1199 = vmatpush.msra.mxu0 %v843
  %1200 = vmatpush.msra.mxu0 %v796
  %1201 = vmatpush.msra.mxu0 %v749
  %1202 = vmatpush.msra.mxu0 %v701
  %1203 = vmatmul.f32.gmra.mxu0 %v1105
  %v1204 = vpop.f32.mrf.mxu0
  %v1205 = vadd.f32 %v1102, %v1204
  %1206 = vdwg.mxu0
  %1207 = vmatpush.msra.mxu0 0.0
  %1208 = vmatpush.msra.mxu0 0.0
  %1209 = vmatpush.msra.mxu0 0.0
  %1210 = vmatpush.msra.mxu0 0.0
  %1211 = vmatpush.msra.mxu0 0.0
  %1212 = vmatpush.msra.mxu0 0.0
  %1213 = vmatpush.msra.mxu0 0.0
  %1214 = vmatpush.msra.mxu0 %v1079
  %1215 = vmatpush.msra.mxu0 %v1032
  %1216 = vmatpush.msra.mxu0 %v985
  %1217 = vmatpush.msra.mxu0 %v938
  %1218 = vmatpush.msra.mxu0 %v891
  %1219 = vmatpush.msra.mxu0 %v844
  %1220 = vmatpush.msra.mxu0 %v797
  %1221 = vmatpush.msra.mxu0 %v750
  %1222 = vmatpush.msra.mxu0 %v702
  %1223 = vmatmul.f32.gmra.mxu0 %v1105
  %v1224 = vpop.f32.mrf.mxu0
  %v1225 = vadd.f32 %v1102, %v1224
  %1226 = vdwg.mxu0
  %1227 = vmatpush.msra.mxu0 0.0
  %1228 = vmatpush.msra.mxu0 0.0
  %1229 = vmatpush.msra.mxu0 0.0
  %1230 = vmatpush.msra.mxu0 0.0
  %1231 = vmatpush.msra.mxu0 0.0
  %1232 = vmatpush.msra.mxu0 0.0
  %1233 = vmatpush.msra.mxu0 0.0
  %1234 = vmatpush.msra.mxu0 %v1080
  %1235 = vmatpush.msra.mxu0 %v1033
  %1236 = vmatpush.msra.mxu0 %v986
  %1237 = vmatpush.msra.mxu0 %v939
  %1238 = vmatpush.msra.mxu0 %v892
  %1239 = vmatpush.msra.mxu0 %v845
  %1240 = vmatpush.msra.mxu0 %v798
  %1241 = vmatpush.msra.mxu0 %v751
  %1242 = vmatpush.msra.mxu0 %v703
  %1243 = vmatmul.f32.gmra.mxu0 %v1105
  %v1244 = vpop.f32.mrf.mxu0
  %v1245 = vadd.f32 %v1102, %v1244
  %1246 = vdwg.mxu0
  %1247 = vmatpush.msra.mxu0 0.0
  %1248 = vmatpush.msra.mxu0 0.0
  %1249 = vmatpush.msra.mxu0 0.0
  %1250 = vmatpush.msra.mxu0 0.0
  %1251 = vmatpush.msra.mxu0 0.0
  %1252 = vmatpush.msra.mxu0 0.0
  %1253 = vmatpush.msra.mxu0 0.0
  %1254 = vmatpush.msra.mxu0 %v1081
  %1255 = vmatpush.msra.mxu0 %v1034
  %1256 = vmatpush.msra.mxu0 %v987
  %1257 = vmatpush.msra.mxu0 %v940
  %1258 = vmatpush.msra.mxu0 %v893
  %1259 = vmatpush.msra.mxu0 %v846
  %1260 = vmatpush.msra.mxu0 %v799
  %1261 = vmatpush.msra.mxu0 %v752
  %1262 = vmatpush.msra.mxu0 %v704
  %1263 = vmatmul.f32.gmra.mxu0 %v1105
  %v1264 = vpop.f32.mrf.mxu0
  %v1265 = vadd.f32 %v1102, %v1264
  %1266 = vdwg.mxu0
  %1267 = vmatpush.msra.mxu0 0.0
  %1268 = vmatpush.msra.mxu0 0.0
  %1269 = vmatpush.msra.mxu0 0.0
  %1270 = vmatpush.msra.mxu0 0.0
  %1271 = vmatpush.msra.mxu0 0.0
  %1272 = vmatpush.msra.mxu0 0.0
  %1273 = vmatpush.msra.mxu0 0.0
  %1274 = vmatpush.msra.mxu0 %v1082
  %1275 = vmatpush.msra.mxu0 %v1035
  %1276 = vmatpush.msra.mxu0 %v988
  %1277 = vmatpush.msra.mxu0 %v941
  %1278 = vmatpush.msra.mxu0 %v894
  %1279 = vmatpush.msra.mxu0 %v847
  %1280 = vmatpush.msra.mxu0 %v800
  %1281 = vmatpush.msra.mxu0 %v753
  %1282 = vmatpush.msra.mxu0 %v705
  %1283 = vmatmul.f32.gmra.mxu0 %v1105
  %v1284 = vpop.f32.mrf.mxu0
  %v1285 = vadd.f32 %v1102, %v1284
  %1286 = vdwg.mxu0
  %1287 = vmatpush.msra.mxu0 0.0
  %1288 = vmatpush.msra.mxu0 0.0
  %1289 = vmatpush.msra.mxu0 0.0
  %1290 = vmatpush.msra.mxu0 0.0
  %1291 = vmatpush.msra.mxu0 0.0
  %1292 = vmatpush.msra.mxu0 0.0
  %1293 = vmatpush.msra.mxu0 0.0
  %1294 = vmatpush.msra.mxu0 %v1083
  %1295 = vmatpush.msra.mxu0 %v1036
  %1296 = vmatpush.msra.mxu0 %v989
  %1297 = vmatpush.msra.mxu0 %v942
  %1298 = vmatpush.msra.mxu0 %v895
  %1299 = vmatpush.msra.mxu0 %v848
  %1300 = vmatpush.msra.mxu0 %v801
  %1301 = vmatpush.msra.mxu0 %v754
  %1302 = vmatpush.msra.mxu0 %v706
  %1303 = vmatmul.f32.gmra.mxu0 %v1105
  %v1304 = vpop.f32.mrf.mxu0
  %v1305 = vadd.f32 %v1102, %v1304
  %1306 = vdwg.mxu0
  %1307 = vmatpush.msra.mxu0 0.0
  %1308 = vmatpush.msra.mxu0 0.0
  %1309 = vmatpush.msra.mxu0 0.0
  %1310 = vmatpush.msra.mxu0 0.0
  %1311 = vmatpush.msra.mxu0 0.0
  %1312 = vmatpush.msra.mxu0 0.0
  %1313 = vmatpush.msra.mxu0 0.0
  %1314 = vmatpush.msra.mxu0 %v1084
  %1315 = vmatpush.msra.mxu0 %v1037
  %1316 = vmatpush.msra.mxu0 %v990
  %1317 = vmatpush.msra.mxu0 %v943
  %1318 = vmatpush.msra.mxu0 %v896
  %1319 = vmatpush.msra.mxu0 %v849
  %1320 = vmatpush.msra.mxu0 %v802
  %1321 = vmatpush.msra.mxu0 %v755
  %1322 = vmatpush.msra.mxu0 %v707
  %1323 = vmatmul.f32.gmra.mxu0 %v1105
  %v1324 = vpop.f32.mrf.mxu0
  %v1325 = vadd.f32 %v1102, %v1324
  %1326 = vdwg.mxu0
  %1327 = vmatpush.msra.mxu0 0.0
  %1328 = vmatpush.msra.mxu0 0.0
  %1329 = vmatpush.msra.mxu0 0.0
  %1330 = vmatpush.msra.mxu0 0.0
  %1331 = vmatpush.msra.mxu0 0.0
  %1332 = vmatpush.msra.mxu0 0.0
  %1333 = vmatpush.msra.mxu0 0.0
  %1334 = vmatpush.msra.mxu0 %v1073
  %1335 = vmatpush.msra.mxu0 %v1026
  %1336 = vmatpush.msra.mxu0 %v979
  %1337 = vmatpush.msra.mxu0 %v932
  %1338 = vmatpush.msra.mxu0 %v885
  %1339 = vmatpush.msra.mxu0 %v838
  %1340 = vmatpush.msra.mxu0 %v791
  %1341 = vmatpush.msra.mxu0 %v744
  %1342 = vmatpush.msra.mxu0 %v708
  %1343 = vmatmul.f32.gmra.mxu0 %v1105
  %v1344 = vpop.f32.mrf.mxu0
  %v1345 = vadd.f32 %v1102, %v1344
  %1346 = vdwg.mxu0
  %v1347 = vmax.f32 %v1125, 0.0
  %v1348 = vmax.f32 %v1145, 0.0
  %v1349 = vmax.f32 %v1165, 0.0
  %v1350 = vmax.f32 %v1185, 0.0
  %v1351 = vmax.f32 %v1205, 0.0
  %v1352 = vmax.f32 %v1225, 0.0
  %v1353 = vmax.f32 %v1245, 0.0
  %v1354 = vmax.f32 %v1265, 0.0
  %v1355 = vmax.f32 %v1285, 0.0
  %v1356 = vmax.f32 %v1305, 0.0
  %v1357 = vmax.f32 %v1325, 0.0
  %v1358 = vmax.f32 %v1345, 0.0
  %1370 = vrot.lane.b32.xlu0 %v1347, 127
  %v1371 = vpop.permute.xlu0 %1370
  %1372 = vrot.lane.b32.xlu0 %v1348, 127
  %v1373 = vpop.permute.xlu0 %1372
  %1374 = vrot.lane.b32.xlu0 %v1349, 127
  %v1375 = vpop.permute.xlu0 %1374
  %1376 = vrot.lane.b32.xlu0 %v1350, 127
  %v1377 = vpop.permute.xlu0 %1376
  %1378 = vrot.lane.b32.xlu0 %v1351, 127
  %v1379 = vpop.permute.xlu0 %1378
  %1380 = vrot.lane.b32.xlu0 %v1352, 127
  %v1381 = vpop.permute.xlu0 %1380
  %1382 = vrot.lane.b32.xlu0 %v1353, 127
  %v1383 = vpop.permute.xlu0 %1382
  %1384 = vrot.lane.b32.xlu0 %v1354, 127
  %v1385 = vpop.permute.xlu0 %1384
  %1386 = vrot.lane.b32.xlu0 %v1355, 127
  %v1387 = vpop.permute.xlu0 %1386
  %1388 = vrot.lane.b32.xlu0 %v1356, 127
  %v1389 = vpop.permute.xlu0 %1388
  %1390 = vrot.lane.b32.xlu0 %v1357, 127
  %v1391 = vpop.permute.xlu0 %1390
  %v1392 = vsel %vm86, %v1371, %v1373
  %v1393 = vsel %vm86, %v1373, %v1375
  %v1394 = vsel %vm86, %v1375, %v1377
  %v1395 = vsel %vm86, %v1377, %v1379
  %v1396 = vsel %vm86, %v1379, %v1381
  %v1397 = vsel %vm86, %v1381, %v1383
  %v1398 = vsel %vm86, %v1383, %v1385
  %v1399 = vsel %vm86, %v1385, %v1387
  %v1400 = vsel %vm86, %v1387, %v1389
  %v1401 = vsel %vm86, %v1389, %v1391
  %v1413 = vmax.f32 %v1347, %v1392
  %v1414 = vmax.f32 %v1348, %v1393
  %v1415 = vmax.f32 %v1349, %v1394
  %v1416 = vmax.f32 %v1350, %v1395
  %v1417 = vmax.f32 %v1351, %v1396
  %v1418 = vmax.f32 %v1352, %v1397
  %v1419 = vmax.f32 %v1353, %v1398
  %v1420 = vmax.f32 %v1354, %v1399
  %v1421 = vmax.f32 %v1355, %v1400
  %v1422 = vmax.f32 %v1356, %v1401
  %v1423 = vmax.f32 %v1357, %v1391
  %1425 = vrot.lane.b32.xlu0 %v1358, 127
  %v1426 = vpop.permute.xlu0 %1425
  %v1427 = vsel %vm86, %v1391, %v1426
  %v1430 = vmax.f32 %v1357, %v1427
  %v1431 = vmax.f32 %v1358, %v1426
  %1444 = vrot.lane.b32.xlu0 %v1413, 104
  %v1445 = vpop.permute.xlu0 %1444
  %1446 = vrot.lane.b32.xlu0 %v1414, 104
  %v1447 = vpop.permute.xlu0 %1446
  %1448 = vrot.lane.b32.xlu0 %v1415, 104
  %v1449 = vpop.permute.xlu0 %1448
  %1450 = vrot.lane.b32.xlu0 %v1416, 104
  %v1451 = vpop.permute.xlu0 %1450
  %1452 = vrot.lane.b32.xlu0 %v1417, 104
  %v1453 = vpop.permute.xlu0 %1452
  %1454 = vrot.lane.b32.xlu0 %v1418, 104
  %v1455 = vpop.permute.xlu0 %1454
  %1456 = vrot.lane.b32.xlu0 %v1419, 104
  %v1457 = vpop.permute.xlu0 %1456
  %1458 = vrot.lane.b32.xlu0 %v1420, 104
  %v1459 = vpop.permute.xlu0 %1458
  %1460 = vrot.lane.b32.xlu0 %v1421, 104
  %v1461 = vpop.permute.xlu0 %1460
  %1462 = vrot.lane.b32.xlu0 %v1422, 104
  %v1463 = vpop.permute.xlu0 %1462
  %1464 = vrot.lane.b32.xlu0 %v1430, 104
  %v1465 = vpop.permute.xlu0 %1464
  %1466 = vrot.lane.b32.xlu0 %v1431, 104
  %v1467 = vpop.permute.xlu0 %1466
  %v1468 = vsel %vm182, %v1445, %v1447
  %v1469 = vsel %vm182, %v1447, %v1449
  %v1470 = vsel %vm182, %v1449, %v1451
  %v1471 = vsel %vm182, %v1451, %v1453
  %v1472 = vsel %vm182, %v1453, %v1455
  %v1473 = vsel %vm182, %v1455, %v1457
  %v1474 = vsel %vm182, %v1457, %v1459
  %v1475 = vsel %vm182, %v1459, %v1461
  %v1476 = vsel %vm182, %v1461, %v1463
  %v1477 = vsel %vm182, %v1463, %v1465
  %v1478 = vsel %vm182, %v1465, %v1467
  %v1490 = vmax.f32 %v1413, %v1468
  %v1491 = vmax.f32 %v1414, %v1469
  %v1492 = vmax.f32 %v1415, %v1470
  %v1493 = vmax.f32 %v1416, %v1471
  %v1494 = vmax.f32 %v1417, %v1472
  %v1495 = vmax.f32 %v1418, %v1473
  %v1496 = vmax.f32 %v1419, %v1474
  %v1497 = vmax.f32 %v1420, %v1475
  %v1498 = vmax.f32 %v1421, %v1476
  %v1499 = vmax.f32 %v1422, %v1477
  %v1500 = vmax.f32 %v1423, %v1478
  %1512 = vrot.lane.b32.xlu0 %v1490, 126
  %v1513 = vpop.permute.xlu0 %1512
  %1514 = vrot.lane.b32.xlu0 %v1491, 126
  %v1515 = vpop.permute.xlu0 %1514
  %1516 = vrot.lane.b32.xlu0 %v1492, 126
  %v1517 = vpop.permute.xlu0 %1516
  %1518 = vrot.lane.b32.xlu0 %v1493, 126
  %v1519 = vpop.permute.xlu0 %1518
  %1520 = vrot.lane.b32.xlu0 %v1494, 126
  %v1521 = vpop.permute.xlu0 %1520
  %1522 = vrot.lane.b32.xlu0 %v1495, 126
  %v1523 = vpop.permute.xlu0 %1522
  %1524 = vrot.lane.b32.xlu0 %v1496, 126
  %v1525 = vpop.permute.xlu0 %1524
  %1526 = vrot.lane.b32.xlu0 %v1497, 126
  %v1527 = vpop.permute.xlu0 %1526
  %1528 = vrot.lane.b32.xlu0 %v1498, 126
  %v1529 = vpop.permute.xlu0 %1528
  %1530 = vrot.lane.b32.xlu0 %v1499, 126
  %v1531 = vpop.permute.xlu0 %1530
  %1532 = vrot.lane.b32.xlu0 %v1500, 126
  %v1533 = vpop.permute.xlu0 %1532
  %v1534 = vsel %vm134, %v1513, %v1515
  %v1535 = vsel %vm134, %v1515, %v1517
  %v1536 = vsel %vm134, %v1517, %v1519
  %v1537 = vsel %vm134, %v1519, %v1521
  %v1538 = vsel %vm134, %v1521, %v1523
  %v1539 = vsel %vm134, %v1523, %v1525
  %v1540 = vsel %vm134, %v1525, %v1527
  %v1541 = vsel %vm134, %v1527, %v1529
  %v1542 = vsel %vm134, %v1529, %v1531
  %v1543 = vsel %vm134, %v1531, %v1533
  %1554 = vrot.lane.b32.xlu0 %v1490, 124
  %v1555 = vpop.permute.xlu0 %1554
  %1556 = vrot.lane.b32.xlu0 %v1491, 124
  %v1557 = vpop.permute.xlu0 %1556
  %1558 = vrot.lane.b32.xlu0 %v1492, 124
  %v1559 = vpop.permute.xlu0 %1558
  %1560 = vrot.lane.b32.xlu0 %v1493, 124
  %v1561 = vpop.permute.xlu0 %1560
  %1562 = vrot.lane.b32.xlu0 %v1494, 124
  %v1563 = vpop.permute.xlu0 %1562
  %1564 = vrot.lane.b32.xlu0 %v1495, 124
  %v1565 = vpop.permute.xlu0 %1564
  %1566 = vrot.lane.b32.xlu0 %v1496, 124
  %v1567 = vpop.permute.xlu0 %1566
  %1568 = vrot.lane.b32.xlu0 %v1497, 124
  %v1569 = vpop.permute.xlu0 %1568
  %1570 = vrot.lane.b32.xlu0 %v1498, 124
  %v1571 = vpop.permute.xlu0 %1570
  %1572 = vrot.lane.b32.xlu0 %v1499, 124
  %v1573 = vpop.permute.xlu0 %1572
  %1574 = vrot.lane.b32.xlu0 %v1500, 124
  %v1575 = vpop.permute.xlu0 %1574
  %vm1576 = vcmask 1014784
  %v1577 = vsel %vm1576, %v1555, %v1557
  %v1578 = vsel %vm1576, %v1557, %v1559
  %v1579 = vsel %vm1576, %v1559, %v1561
  %v1580 = vsel %vm1576, %v1561, %v1563
  %v1581 = vsel %vm1576, %v1563, %v1565
  %v1582 = vsel %vm1576, %v1565, %v1567
  %v1583 = vsel %vm1576, %v1567, %v1569
  %v1584 = vsel %vm1576, %v1569, %v1571
  %v1585 = vsel %vm1576, %v1571, %v1573
  %v1586 = vsel %vm1576, %v1573, %v1575
  %1597 = vrot.lane.b32.xlu0 %v1490, 80
  %v1598 = vpop.permute.xlu0 %1597
  %1599 = vrot.lane.b32.xlu0 %v1491, 80
  %v1600 = vpop.permute.xlu0 %1599
  %1601 = vrot.lane.b32.xlu0 %v1492, 80
  %v1602 = vpop.permute.xlu0 %1601
  %1603 = vrot.lane.b32.xlu0 %v1493, 80
  %v1604 = vpop.permute.xlu0 %1603
  %1605 = vrot.lane.b32.xlu0 %v1494, 80
  %v1606 = vpop.permute.xlu0 %1605
  %1607 = vrot.lane.b32.xlu0 %v1495, 80
  %v1608 = vpop.permute.xlu0 %1607
  %1609 = vrot.lane.b32.xlu0 %v1496, 80
  %v1610 = vpop.permute.xlu0 %1609
  %1611 = vrot.lane.b32.xlu0 %v1497, 80
  %v1612 = vpop.permute.xlu0 %1611
  %1613 = vrot.lane.b32.xlu0 %v1498, 80
  %v1614 = vpop.permute.xlu0 %1613
  %1615 = vrot.lane.b32.xlu0 %v1499, 80
  %v1616 = vpop.permute.xlu0 %1615
  %1617 = vrot.lane.b32.xlu0 %v1500, 80
  %v1618 = vpop.permute.xlu0 %1617
  %v1619 = vsel %vm326, %v1598, %v1600
  %v1620 = vsel %vm326, %v1600, %v1602
  %v1621 = vsel %vm326, %v1602, %v1604
  %v1622 = vsel %vm326, %v1604, %v1606
  %v1623 = vsel %vm326, %v1606, %v1608
  %v1624 = vsel %vm326, %v1608, %v1610
  %v1625 = vsel %vm326, %v1610, %v1612
  %v1626 = vsel %vm326, %v1612, %v1614
  %v1627 = vsel %vm326, %v1614, %v1616
  %v1628 = vsel %vm326, %v1616, %v1618
  %1639 = vrot.lane.b32.xlu0 %v1490, 78
  %v1640 = vpop.permute.xlu0 %1639
  %1641 = vrot.lane.b32.xlu0 %v1491, 78
  %v1642 = vpop.permute.xlu0 %1641
  %1643 = vrot.lane.b32.xlu0 %v1492, 78
  %v1644 = vpop.permute.xlu0 %1643
  %1645 = vrot.lane.b32.xlu0 %v1493, 78
  %v1646 = vpop.permute.xlu0 %1645
  %1647 = vrot.lane.b32.xlu0 %v1494, 78
  %v1648 = vpop.permute.xlu0 %1647
  %1649 = vrot.lane.b32.xlu0 %v1495, 78
  %v1650 = vpop.permute.xlu0 %1649
  %1651 = vrot.lane.b32.xlu0 %v1496, 78
  %v1652 = vpop.permute.xlu0 %1651
  %1653 = vrot.lane.b32.xlu0 %v1497, 78
  %v1654 = vpop.permute.xlu0 %1653
  %1655 = vrot.lane.b32.xlu0 %v1498, 78
  %v1656 = vpop.permute.xlu0 %1655
  %1657 = vrot.lane.b32.xlu0 %v1499, 78
  %v1658 = vpop.permute.xlu0 %1657
  %1659 = vrot.lane.b32.xlu0 %v1500, 78
  %v1660 = vpop.permute.xlu0 %1659
  %v1661 = vsel %vm422, %v1640, %v1642
  %v1662 = vsel %vm422, %v1642, %v1644
  %v1663 = vsel %vm422, %v1644, %v1646
  %v1664 = vsel %vm422, %v1646, %v1648
  %v1665 = vsel %vm422, %v1648, %v1650
  %v1666 = vsel %vm422, %v1650, %v1652
  %v1667 = vsel %vm422, %v1652, %v1654
  %v1668 = vsel %vm422, %v1654, %v1656
  %v1669 = vsel %vm422, %v1656, %v1658
  %v1670 = vsel %vm422, %v1658, %v1660
  %1681 = vrot.lane.b32.xlu0 %v1490, 76
  %v1682 = vpop.permute.xlu0 %1681
  %1683 = vrot.lane.b32.xlu0 %v1491, 76
  %v1684 = vpop.permute.xlu0 %1683
  %1685 = vrot.lane.b32.xlu0 %v1492, 76
  %v1686 = vpop.permute.xlu0 %1685
  %1687 = vrot.lane.b32.xlu0 %v1493, 76
  %v1688 = vpop.permute.xlu0 %1687
  %1689 = vrot.lane.b32.xlu0 %v1494, 76
  %v1690 = vpop.permute.xlu0 %1689
  %1691 = vrot.lane.b32.xlu0 %v1495, 76
  %v1692 = vpop.permute.xlu0 %1691
  %1693 = vrot.lane.b32.xlu0 %v1496, 76
  %v1694 = vpop.permute.xlu0 %1693
  %1695 = vrot.lane.b32.xlu0 %v1497, 76
  %v1696 = vpop.permute.xlu0 %1695
  %1697 = vrot.lane.b32.xlu0 %v1498, 76
  %v1698 = vpop.permute.xlu0 %1697
  %1699 = vrot.lane.b32.xlu0 %v1499, 76
  %v1700 = vpop.permute.xlu0 %1699
  %1701 = vrot.lane.b32.xlu0 %v1500, 76
  %v1702 = vpop.permute.xlu0 %1701
  %vm1703 = vcmask 621568
  %v1704 = vsel %vm1703, %v1682, %v1684
  %v1705 = vsel %vm1703, %v1684, %v1686
  %v1706 = vsel %vm1703, %v1686, %v1688
  %v1707 = vsel %vm1703, %v1688, %v1690
  %v1708 = vsel %vm1703, %v1690, %v1692
  %v1709 = vsel %vm1703, %v1692, %v1694
  %v1710 = vsel %vm1703, %v1694, %v1696
  %v1711 = vsel %vm1703, %v1696, %v1698
  %v1712 = vsel %vm1703, %v1698, %v1700
  %v1713 = vsel %vm1703, %v1700, %v1702
  %1724 = vrot.lane.b32.xlu0 %v1490, 32
  %v1725 = vpop.permute.xlu0 %1724
  %1726 = vrot.lane.b32.xlu0 %v1491, 32
  %v1727 = vpop.permute.xlu0 %1726
  %1728 = vrot.lane.b32.xlu0 %v1492, 32
  %v1729 = vpop.permute.xlu0 %1728
  %1730 = vrot.lane.b32.xlu0 %v1493, 32
  %v1731 = vpop.permute.xlu0 %1730
  %1732 = vrot.lane.b32.xlu0 %v1494, 32
  %v1733 = vpop.permute.xlu0 %1732
  %1734 = vrot.lane.b32.xlu0 %v1495, 32
  %v1735 = vpop.permute.xlu0 %1734
  %1736 = vrot.lane.b32.xlu0 %v1496, 32
  %v1737 = vpop.permute.xlu0 %1736
  %1738 = vrot.lane.b32.xlu0 %v1497, 32
  %v1739 = vpop.permute.xlu0 %1738
  %1740 = vrot.lane.b32.xlu0 %v1498, 32
  %v1741 = vpop.permute.xlu0 %1740
  %1742 = vrot.lane.b32.xlu0 %v1499, 32
  %v1743 = vpop.permute.xlu0 %1742
  %1744 = vrot.lane.b32.xlu0 %v1500, 32
  %v1745 = vpop.permute.xlu0 %1744
  %vm1746 = vcmask 261120
  %v1747 = vsel %vm1746, %v1725, %v1727
  %v1748 = vsel %vm1746, %v1727, %v1729
  %v1749 = vsel %vm1746, %v1729, %v1731
  %v1750 = vsel %vm1746, %v1731, %v1733
  %v1751 = vsel %vm1746, %v1733, %v1735
  %v1752 = vsel %vm1746, %v1735, %v1737
  %v1753 = vsel %vm1746, %v1737, %v1739
  %v1754 = vsel %vm1746, %v1739, %v1741
  %v1755 = vsel %vm1746, %v1741, %v1743
  %v1756 = vsel %vm1746, %v1743, %v1745
  %1767 = vrot.lane.b32.xlu0 %v1490, 30
  %v1768 = vpop.permute.xlu0 %1767
  %1769 = vrot.lane.b32.xlu0 %v1491, 30
  %v1770 = vpop.permute.xlu0 %1769
  %1771 = vrot.lane.b32.xlu0 %v1492, 30
  %v1772 = vpop.permute.xlu0 %1771
  %1773 = vrot.lane.b32.xlu0 %v1493, 30
  %v1774 = vpop.permute.xlu0 %1773
  %1775 = vrot.lane.b32.xlu0 %v1494, 30
  %v1776 = vpop.permute.xlu0 %1775
  %1777 = vrot.lane.b32.xlu0 %v1495, 30
  %v1778 = vpop.permute.xlu0 %1777
  %1779 = vrot.lane.b32.xlu0 %v1496, 30
  %v1780 = vpop.permute.xlu0 %1779
  %1781 = vrot.lane.b32.xlu0 %v1497, 30
  %v1782 = vpop.permute.xlu0 %1781
  %1783 = vrot.lane.b32.xlu0 %v1498, 30
  %v1784 = vpop.permute.xlu0 %1783
  %1785 = vrot.lane.b32.xlu0 %v1499, 30
  %v1786 = vpop.permute.xlu0 %1785
  %1787 = vrot.lane.b32.xlu0 %v1500, 30
  %v1788 = vpop.permute.xlu0 %1787
  %vm1789 = vcmask 244736
  %v1790 = vsel %vm1789, %v1768, %v1770
  %v1791 = vsel %vm1789, %v1770, %v1772
  %v1792 = vsel %vm1789, %v1772, %v1774
  %v1793 = vsel %vm1789, %v1774, %v1776
  %v1794 = vsel %vm1789, %v1776, %v1778
  %v1795 = vsel %vm1789, %v1778, %v1780
  %v1796 = vsel %vm1789, %v1780, %v1782
  %v1797 = vsel %vm1789, %v1782, %v1784
  %v1798 = vsel %vm1789, %v1784, %v1786
  %v1799 = vsel %vm1789, %v1786, %v1788
  %1810 = vrot.lane.b32.xlu0 %v1490, 28
  %v1811 = vpop.permute.xlu0 %1810
  %1812 = vrot.lane.b32.xlu0 %v1491, 28
  %v1813 = vpop.permute.xlu0 %1812
  %1814 = vrot.lane.b32.xlu0 %v1492, 28
  %v1815 = vpop.permute.xlu0 %1814
  %1816 = vrot.lane.b32.xlu0 %v1493, 28
  %v1817 = vpop.permute.xlu0 %1816
  %1818 = vrot.lane.b32.xlu0 %v1494, 28
  %v1819 = vpop.permute.xlu0 %1818
  %1820 = vrot.lane.b32.xlu0 %v1495, 28
  %v1821 = vpop.permute.xlu0 %1820
  %1822 = vrot.lane.b32.xlu0 %v1496, 28
  %v1823 = vpop.permute.xlu0 %1822
  %1824 = vrot.lane.b32.xlu0 %v1497, 28
  %v1825 = vpop.permute.xlu0 %1824
  %1826 = vrot.lane.b32.xlu0 %v1498, 28
  %v1827 = vpop.permute.xlu0 %1826
  %1828 = vrot.lane.b32.xlu0 %v1499, 28
  %v1829 = vpop.permute.xlu0 %1828
  %1830 = vrot.lane.b32.xlu0 %v1500, 28
  %v1831 = vpop.permute.xlu0 %1830
  %vm1832 = vcmask 228352
  %v1833 = vsel %vm1832, %v1811, %v1813
  %v1834 = vsel %vm1832, %v1813, %v1815
  %v1835 = vsel %vm1832, %v1815, %v1817
  %v1836 = vsel %vm1832, %v1817, %v1819
  %v1837 = vsel %vm1832, %v1819, %v1821
  %v1838 = vsel %vm1832, %v1821, %v1823
  %v1839 = vsel %vm1832, %v1823, %v1825
  %v1840 = vsel %vm1832, %v1825, %v1827
  %v1841 = vsel %vm1832, %v1827, %v1829
  %v1842 = vsel %vm1832, %v1829, %v1831
  %v1853 = vld [vmem:[%s5] sm:$0xff]
  %v1854 = vld [vmem:[%s6] sm:$0xff]
  %1856 = vset.pattern.permute.xlu0 0
  %1857 = vperm.xlu0 %1856, %v1854
  %v1858 = vpop.permute.xlu0 %1857
  %v1861 = vsel %vm453, %v1853, 0
  %1863 = vmatpush.msra.mxu0 0.0
  %1864 = vmatpush.msra.mxu0 0.0
  %1865 = vmatpush.msra.mxu0 0.0
  %1866 = vmatpush.msra.mxu0 0.0
  %1867 = vmatpush.msra.mxu0 0.0
  %1868 = vmatpush.msra.mxu0 0.0
  %1869 = vmatpush.msra.mxu0 0.0
  %1870 = vmatpush.msra.mxu0 %v1833
  %1871 = vmatpush.msra.mxu0 %v1790
  %1872 = vmatpush.msra.mxu0 %v1747
  %1873 = vmatpush.msra.mxu0 %v1704
  %1874 = vmatpush.msra.mxu0 %v1661
  %1875 = vmatpush.msra.mxu0 %v1619
  %1876 = vmatpush.msra.mxu0 %v1577
  %1877 = vmatpush.msra.mxu0 %v1534
  %1878 = vmatpush.msra.mxu0 %v1490
  %1879 = vmatmul.f32.gmra.mxu0 %v1861
  %v1880 = vpop.f32.mrf.mxu0
  %v1881 = vadd.f32 %v1858, %v1880
  %1882 = vdwg.mxu0
  %1883 = vmatpush.msra.mxu0 0.0
  %1884 = vmatpush.msra.mxu0 0.0
  %1885 = vmatpush.msra.mxu0 0.0
  %1886 = vmatpush.msra.mxu0 0.0
  %1887 = vmatpush.msra.mxu0 0.0
  %1888 = vmatpush.msra.mxu0 0.0
  %1889 = vmatpush.msra.mxu0 0.0
  %1890 = vmatpush.msra.mxu0 %v1834
  %1891 = vmatpush.msra.mxu0 %v1791
  %1892 = vmatpush.msra.mxu0 %v1748
  %1893 = vmatpush.msra.mxu0 %v1705
  %1894 = vmatpush.msra.mxu0 %v1662
  %1895 = vmatpush.msra.mxu0 %v1620
  %1896 = vmatpush.msra.mxu0 %v1578
  %1897 = vmatpush.msra.mxu0 %v1535
  %1898 = vmatpush.msra.mxu0 %v1491
  %1899 = vmatmul.f32.gmra.mxu0 %v1861
  %v1900 = vpop.f32.mrf.mxu0
  %v1901 = vadd.f32 %v1858, %v1900
  %1902 = vdwg.mxu0
  %1903 = vmatpush.msra.mxu0 0.0
  %1904 = vmatpush.msra.mxu0 0.0
  %1905 = vmatpush.msra.mxu0 0.0
  %1906 = vmatpush.msra.mxu0 0.0
  %1907 = vmatpush.msra.mxu0 0.0
  %1908 = vmatpush.msra.mxu0 0.0
  %1909 = vmatpush.msra.mxu0 0.0
  %1910 = vmatpush.msra.mxu0 %v1835
  %1911 = vmatpush.msra.mxu0 %v1792
  %1912 = vmatpush.msra.mxu0 %v1749
  %1913 = vmatpush.msra.mxu0 %v1706
  %1914 = vmatpush.msra.mxu0 %v1663
  %1915 = vmatpush.msra.mxu0 %v1621
  %1916 = vmatpush.msra.mxu0 %v1579
  %1917 = vmatpush.msra.mxu0 %v1536
  %1918 = vmatpush.msra.mxu0 %v1492
  %1919 = vmatmul.f32.gmra.mxu0 %v1861
  %v1920 = vpop.f32.mrf.mxu0
  %v1921 = vadd.f32 %v1858, %v1920
  %1922 = vdwg.mxu0
  %1923 = vmatpush.msra.mxu0 0.0
  %1924 = vmatpush.msra.mxu0 0.0
  %1925 = vmatpush.msra.mxu0 0.0
  %1926 = vmatpush.msra.mxu0 0.0
  %1927 = vmatpush.msra.mxu0 0.0
  %1928 = vmatpush.msra.mxu0 0.0
  %1929 = vmatpush.msra.mxu0 0.0
  %1930 = vmatpush.msra.mxu0 %v1836
  %1931 = vmatpush.msra.mxu0 %v1793
  %1932 = vmatpush.msra.mxu0 %v1750
  %1933 = vmatpush.msra.mxu0 %v1707
  %1934 = vmatpush.msra.mxu0 %v1664
  %1935 = vmatpush.msra.mxu0 %v1622
  %1936 = vmatpush.msra.mxu0 %v1580
  %1937 = vmatpush.msra.mxu0 %v1537
  %1938 = vmatpush.msra.mxu0 %v1493
  %1939 = vmatmul.f32.gmra.mxu0 %v1861
  %v1940 = vpop.f32.mrf.mxu0
  %v1941 = vadd.f32 %v1858, %v1940
  %1942 = vdwg.mxu0
  %1943 = vmatpush.msra.mxu0 0.0
  %1944 = vmatpush.msra.mxu0 0.0
  %1945 = vmatpush.msra.mxu0 0.0
  %1946 = vmatpush.msra.mxu0 0.0
  %1947 = vmatpush.msra.mxu0 0.0
  %1948 = vmatpush.msra.mxu0 0.0
  %1949 = vmatpush.msra.mxu0 0.0
  %1950 = vmatpush.msra.mxu0 %v1837
  %1951 = vmatpush.msra.mxu0 %v1794
  %1952 = vmatpush.msra.mxu0 %v1751
  %1953 = vmatpush.msra.mxu0 %v1708
  %1954 = vmatpush.msra.mxu0 %v1665
  %1955 = vmatpush.msra.mxu0 %v1623
  %1956 = vmatpush.msra.mxu0 %v1581
  %1957 = vmatpush.msra.mxu0 %v1538
  %1958 = vmatpush.msra.mxu0 %v1494
  %1959 = vmatmul.f32.gmra.mxu0 %v1861
  %v1960 = vpop.f32.mrf.mxu0
  %v1961 = vadd.f32 %v1858, %v1960
  %1962 = vdwg.mxu0
  %1963 = vmatpush.msra.mxu0 0.0
  %1964 = vmatpush.msra.mxu0 0.0
  %1965 = vmatpush.msra.mxu0 0.0
  %1966 = vmatpush.msra.mxu0 0.0
  %1967 = vmatpush.msra.mxu0 0.0
  %1968 = vmatpush.msra.mxu0 0.0
  %1969 = vmatpush.msra.mxu0 0.0
  %1970 = vmatpush.msra.mxu0 %v1838
  %1971 = vmatpush.msra.mxu0 %v1795
  %1972 = vmatpush.msra.mxu0 %v1752
  %1973 = vmatpush.msra.mxu0 %v1709
  %1974 = vmatpush.msra.mxu0 %v1666
  %1975 = vmatpush.msra.mxu0 %v1624
  %1976 = vmatpush.msra.mxu0 %v1582
  %1977 = vmatpush.msra.mxu0 %v1539
  %1978 = vmatpush.msra.mxu0 %v1495
  %1979 = vmatmul.f32.gmra.mxu0 %v1861
  %v1980 = vpop.f32.mrf.mxu0
  %v1981 = vadd.f32 %v1858, %v1980
  %1982 = vdwg.mxu0
  %1983 = vmatpush.msra.mxu0 0.0
  %1984 = vmatpush.msra.mxu0 0.0
  %1985 = vmatpush.msra.mxu0 0.0
  %1986 = vmatpush.msra.mxu0 0.0
  %1987 = vmatpush.msra.mxu0 0.0
  %1988 = vmatpush.msra.mxu0 0.0
  %1989 = vmatpush.msra.mxu0 0.0
  %1990 = vmatpush.msra.mxu0 %v1839
  %1991 = vmatpush.msra.mxu0 %v1796
  %1992 = vmatpush.msra.mxu0 %v1753
  %1993 = vmatpush.msra.mxu0 %v1710
  %1994 = vmatpush.msra.mxu0 %v1667
  %1995 = vmatpush.msra.mxu0 %v1625
  %1996 = vmatpush.msra.mxu0 %v1583
  %1997 = vmatpush.msra.mxu0 %v1540
  %1998 = vmatpush.msra.mxu0 %v1496
  %1999 = vmatmul.f32.gmra.mxu0 %v1861
  %v2000 = vpop.f32.mrf.mxu0
  %v2001 = vadd.f32 %v1858, %v2000
  %2002 = vdwg.mxu0
  %2003 = vmatpush.msra.mxu0 0.0
  %2004 = vmatpush.msra.mxu0 0.0
  %2005 = vmatpush.msra.mxu0 0.0
  %2006 = vmatpush.msra.mxu0 0.0
  %2007 = vmatpush.msra.mxu0 0.0
  %2008 = vmatpush.msra.mxu0 0.0
  %2009 = vmatpush.msra.mxu0 0.0
  %2010 = vmatpush.msra.mxu0 %v1840
  %2011 = vmatpush.msra.mxu0 %v1797
  %2012 = vmatpush.msra.mxu0 %v1754
  %2013 = vmatpush.msra.mxu0 %v1711
  %2014 = vmatpush.msra.mxu0 %v1668
  %2015 = vmatpush.msra.mxu0 %v1626
  %2016 = vmatpush.msra.mxu0 %v1584
  %2017 = vmatpush.msra.mxu0 %v1541
  %2018 = vmatpush.msra.mxu0 %v1497
  %2019 = vmatmul.f32.gmra.mxu0 %v1861
  %v2020 = vpop.f32.mrf.mxu0
  %v2021 = vadd.f32 %v1858, %v2020
  %2022 = vdwg.mxu0
  %2023 = vmatpush.msra.mxu0 0.0
  %2024 = vmatpush.msra.mxu0 0.0
  %2025 = vmatpush.msra.mxu0 0.0
  %2026 = vmatpush.msra.mxu0 0.0
  %2027 = vmatpush.msra.mxu0 0.0
  %2028 = vmatpush.msra.mxu0 0.0
  %2029 = vmatpush.msra.mxu0 0.0
  %2030 = vmatpush.msra.mxu0 %v1841
  %2031 = vmatpush.msra.mxu0 %v1798
  %2032 = vmatpush.msra.mxu0 %v1755
  %2033 = vmatpush.msra.mxu0 %v1712
  %2034 = vmatpush.msra.mxu0 %v1669
  %2035 = vmatpush.msra.mxu0 %v1627
  %2036 = vmatpush.msra.mxu0 %v1585
  %2037 = vmatpush.msra.mxu0 %v1542
  %2038 = vmatpush.msra.mxu0 %v1498
  %2039 = vmatmul.f32.gmra.mxu0 %v1861
  %v2040 = vpop.f32.mrf.mxu0
  %v2041 = vadd.f32 %v1858, %v2040
  %2042 = vdwg.mxu0
  %2043 = vmatpush.msra.mxu0 0.0
  %2044 = vmatpush.msra.mxu0 0.0
  %2045 = vmatpush.msra.mxu0 0.0
  %2046 = vmatpush.msra.mxu0 0.0
  %2047 = vmatpush.msra.mxu0 0.0
  %2048 = vmatpush.msra.mxu0 0.0
  %2049 = vmatpush.msra.mxu0 0.0
  %2050 = vmatpush.msra.mxu0 %v1842
  %2051 = vmatpush.msra.mxu0 %v1799
  %2052 = vmatpush.msra.mxu0 %v1756
  %2053 = vmatpush.msra.mxu0 %v1713
  %2054 = vmatpush.msra.mxu0 %v1670
  %2055 = vmatpush.msra.mxu0 %v1628
  %2056 = vmatpush.msra.mxu0 %v1586
  %2057 = vmatpush.msra.mxu0 %v1543
  %2058 = vmatpush.msra.mxu0 %v1499
  %2059 = vmatmul.f32.gmra.mxu0 %v1861
  %v2060 = vpop.f32.mrf.mxu0
  %v2061 = vadd.f32 %v1858, %v2060
  %2062 = vdwg.mxu0
  %v2063 = vmax.f32 %v1881, 0.0
  %v2064 = vmax.f32 %v1901, 0.0
  %v2065 = vmax.f32 %v1921, 0.0
  %v2066 = vmax.f32 %v1941, 0.0
  %v2067 = vmax.f32 %v1961, 0.0
  %v2068 = vmax.f32 %v1981, 0.0
  %v2069 = vmax.f32 %v2001, 0.0
  %v2070 = vmax.f32 %v2021, 0.0
  %v2071 = vmax.f32 %v2041, 0.0
  %v2072 = vmax.f32 %v2061, 0.0
  %2083 = vrot.lane.b32.xlu0 %v2063, 126
  %v2084 = vpop.permute.xlu0 %2083
  %2085 = vrot.lane.b32.xlu0 %v2064, 126
  %v2086 = vpop.permute.xlu0 %2085
  %2087 = vrot.lane.b32.xlu0 %v2065, 126
  %v2088 = vpop.permute.xlu0 %2087
  %2089 = vrot.lane.b32.xlu0 %v2066, 126
  %v2090 = vpop.permute.xlu0 %2089
  %2091 = vrot.lane.b32.xlu0 %v2067, 126
  %v2092 = vpop.permute.xlu0 %2091
  %2093 = vrot.lane.b32.xlu0 %v2068, 126
  %v2094 = vpop.permute.xlu0 %2093
  %2095 = vrot.lane.b32.xlu0 %v2069, 126
  %v2096 = vpop.permute.xlu0 %2095
  %2097 = vrot.lane.b32.xlu0 %v2070, 126
  %v2098 = vpop.permute.xlu0 %2097
  %2099 = vrot.lane.b32.xlu0 %v2071, 126
  %v2100 = vpop.permute.xlu0 %2099
  %2101 = vrot.lane.b32.xlu0 %v2072, 126
  %v2102 = vpop.permute.xlu0 %2101
  %v2103 = vsel %vm134, %v2084, %v2086
  %v2104 = vsel %vm134, %v2086, %v2088
  %v2105 = vsel %vm134, %v2088, %v2090
  %v2106 = vsel %vm134, %v2090, %v2092
  %v2107 = vsel %vm134, %v2092, %v2094
  %v2108 = vsel %vm134, %v2094, %v2096
  %v2109 = vsel %vm134, %v2096, %v2098
  %v2110 = vsel %vm134, %v2098, %v2100
  %v2111 = vsel %vm134, %v2100, %v2102
  %2121 = vrot.lane.b32.xlu0 %v2063, 124
  %v2122 = vpop.permute.xlu0 %2121
  %2123 = vrot.lane.b32.xlu0 %v2064, 124
  %v2124 = vpop.permute.xlu0 %2123
  %2125 = vrot.lane.b32.xlu0 %v2065, 124
  %v2126 = vpop.permute.xlu0 %2125
  %2127 = vrot.lane.b32.xlu0 %v2066, 124
  %v2128 = vpop.permute.xlu0 %2127
  %2129 = vrot.lane.b32.xlu0 %v2067, 124
  %v2130 = vpop.permute.xlu0 %2129
  %2131 = vrot.lane.b32.xlu0 %v2068, 124
  %v2132 = vpop.permute.xlu0 %2131
  %2133 = vrot.lane.b32.xlu0 %v2069, 124
  %v2134 = vpop.permute.xlu0 %2133
  %2135 = vrot.lane.b32.xlu0 %v2070, 124
  %v2136 = vpop.permute.xlu0 %2135
  %2137 = vrot.lane.b32.xlu0 %v2071, 124
  %v2138 = vpop.permute.xlu0 %2137
  %2139 = vrot.lane.b32.xlu0 %v2072, 124
  %v2140 = vpop.permute.xlu0 %2139
  %v2141 = vsel %vm1576, %v2122, %v2124
  %v2142 = vsel %vm1576, %v2124, %v2126
  %v2143 = vsel %vm1576, %v2126, %v2128
  %v2144 = vsel %vm1576, %v2128, %v2130
  %v2145 = vsel %vm1576, %v2130, %v2132
  %v2146 = vsel %vm1576, %v2132, %v2134
  %v2147 = vsel %vm1576, %v2134, %v2136
  %v2148 = vsel %vm1576, %v2136, %v2138
  %v2149 = vsel %vm1576, %v2138, %v2140
  %2159 = vrot.lane.b32.xlu0 %v2063, 80
  %v2160 = vpop.permute.xlu0 %2159
  %2161 = vrot.lane.b32.xlu0 %v2064, 80
  %v2162 = vpop.permute.xlu0 %2161
  %2163 = vrot.lane.b32.xlu0 %v2065, 80
  %v2164 = vpop.permute.xlu0 %2163
  %2165 = vrot.lane.b32.xlu0 %v2066, 80
  %v2166 = vpop.permute.xlu0 %2165
  %2167 = vrot.lane.b32.xlu0 %v2067, 80
  %v2168 = vpop.permute.xlu0 %2167
  %2169 = vrot.lane.b32.xlu0 %v2068, 80
  %v2170 = vpop.permute.xlu0 %2169
  %2171 = vrot.lane.b32.xlu0 %v2069, 80
  %v2172 = vpop.permute.xlu0 %2171
  %2173 = vrot.lane.b32.xlu0 %v2070, 80
  %v2174 = vpop.permute.xlu0 %2173
  %2175 = vrot.lane.b32.xlu0 %v2071, 80
  %v2176 = vpop.permute.xlu0 %2175
  %2177 = vrot.lane.b32.xlu0 %v2072, 80
  %v2178 = vpop.permute.xlu0 %2177
  %v2179 = vsel %vm326, %v2160, %v2162
  %v2180 = vsel %vm326, %v2162, %v2164
  %v2181 = vsel %vm326, %v2164, %v2166
  %v2182 = vsel %vm326, %v2166, %v2168
  %v2183 = vsel %vm326, %v2168, %v2170
  %v2184 = vsel %vm326, %v2170, %v2172
  %v2185 = vsel %vm326, %v2172, %v2174
  %v2186 = vsel %vm326, %v2174, %v2176
  %v2187 = vsel %vm326, %v2176, %v2178
  %2197 = vrot.lane.b32.xlu0 %v2063, 78
  %v2198 = vpop.permute.xlu0 %2197
  %2199 = vrot.lane.b32.xlu0 %v2064, 78
  %v2200 = vpop.permute.xlu0 %2199
  %2201 = vrot.lane.b32.xlu0 %v2065, 78
  %v2202 = vpop.permute.xlu0 %2201
  %2203 = vrot.lane.b32.xlu0 %v2066, 78
  %v2204 = vpop.permute.xlu0 %2203
  %2205 = vrot.lane.b32.xlu0 %v2067, 78
  %v2206 = vpop.permute.xlu0 %2205
  %2207 = vrot.lane.b32.xlu0 %v2068, 78
  %v2208 = vpop.permute.xlu0 %2207
  %2209 = vrot.lane.b32.xlu0 %v2069, 78
  %v2210 = vpop.permute.xlu0 %2209
  %2211 = vrot.lane.b32.xlu0 %v2070, 78
  %v2212 = vpop.permute.xlu0 %2211
  %2213 = vrot.lane.b32.xlu0 %v2071, 78
  %v2214 = vpop.permute.xlu0 %2213
  %2215 = vrot.lane.b32.xlu0 %v2072, 78
  %v2216 = vpop.permute.xlu0 %2215
  %v2217 = vsel %vm422, %v2198, %v2200
  %v2218 = vsel %vm422, %v2200, %v2202
  %v2219 = vsel %vm422, %v2202, %v2204
  %v2220 = vsel %vm422, %v2204, %v2206
  %v2221 = vsel %vm422, %v2206, %v2208
  %v2222 = vsel %vm422, %v2208, %v2210
  %v2223 = vsel %vm422, %v2210, %v2212
  %v2224 = vsel %vm422, %v2212, %v2214
  %v2225 = vsel %vm422, %v2214, %v2216
  %2235 = vrot.lane.b32.xlu0 %v2063, 76
  %v2236 = vpop.permute.xlu0 %2235
  %2237 = vrot.lane.b32.xlu0 %v2064, 76
  %v2238 = vpop.permute.xlu0 %2237
  %2239 = vrot.lane.b32.xlu0 %v2065, 76
  %v2240 = vpop.permute.xlu0 %2239
  %2241 = vrot.lane.b32.xlu0 %v2066, 76
  %v2242 = vpop.permute.xlu0 %2241
  %2243 = vrot.lane.b32.xlu0 %v2067, 76
  %v2244 = vpop.permute.xlu0 %2243
  %2245 = vrot.lane.b32.xlu0 %v2068, 76
  %v2246 = vpop.permute.xlu0 %2245
  %2247 = vrot.lane.b32.xlu0 %v2069, 76
  %v2248 = vpop.permute.xlu0 %2247
  %2249 = vrot.lane.b32.xlu0 %v2070, 76
  %v2250 = vpop.permute.xlu0 %2249
  %2251 = vrot.lane.b32.xlu0 %v2071, 76
  %v2252 = vpop.permute.xlu0 %2251
  %2253 = vrot.lane.b32.xlu0 %v2072, 76
  %v2254 = vpop.permute.xlu0 %2253
  %v2255 = vsel %vm1703, %v2236, %v2238
  %v2256 = vsel %vm1703, %v2238, %v2240
  %v2257 = vsel %vm1703, %v2240, %v2242
  %v2258 = vsel %vm1703, %v2242, %v2244
  %v2259 = vsel %vm1703, %v2244, %v2246
  %v2260 = vsel %vm1703, %v2246, %v2248
  %v2261 = vsel %vm1703, %v2248, %v2250
  %v2262 = vsel %vm1703, %v2250, %v2252
  %v2263 = vsel %vm1703, %v2252, %v2254
  %2273 = vrot.lane.b32.xlu0 %v2063, 32
  %v2274 = vpop.permute.xlu0 %2273
  %2275 = vrot.lane.b32.xlu0 %v2064, 32
  %v2276 = vpop.permute.xlu0 %2275
  %2277 = vrot.lane.b32.xlu0 %v2065, 32
  %v2278 = vpop.permute.xlu0 %2277
  %2279 = vrot.lane.b32.xlu0 %v2066, 32
  %v2280 = vpop.permute.xlu0 %2279
  %2281 = vrot.lane.b32.xlu0 %v2067, 32
  %v2282 = vpop.permute.xlu0 %2281
  %2283 = vrot.lane.b32.xlu0 %v2068, 32
  %v2284 = vpop.permute.xlu0 %2283
  %2285 = vrot.lane.b32.xlu0 %v2069, 32
  %v2286 = vpop.permute.xlu0 %2285
  %2287 = vrot.lane.b32.xlu0 %v2070, 32
  %v2288 = vpop.permute.xlu0 %2287
  %2289 = vrot.lane.b32.xlu0 %v2071, 32
  %v2290 = vpop.permute.xlu0 %2289
  %2291 = vrot.lane.b32.xlu0 %v2072, 32
  %v2292 = vpop.permute.xlu0 %2291
  %v2293 = vsel %vm1746, %v2274, %v2276
  %v2294 = vsel %vm1746, %v2276, %v2278
  %v2295 = vsel %vm1746, %v2278, %v2280
  %v2296 = vsel %vm1746, %v2280, %v2282
  %v2297 = vsel %vm1746, %v2282, %v2284
  %v2298 = vsel %vm1746, %v2284, %v2286
  %v2299 = vsel %vm1746, %v2286, %v2288
  %v2300 = vsel %vm1746, %v2288, %v2290
  %v2301 = vsel %vm1746, %v2290, %v2292
  %2311 = vrot.lane.b32.xlu0 %v2063, 30
  %v2312 = vpop.permute.xlu0 %2311
  %2313 = vrot.lane.b32.xlu0 %v2064, 30
  %v2314 = vpop.permute.xlu0 %2313
  %2315 = vrot.lane.b32.xlu0 %v2065, 30
  %v2316 = vpop.permute.xlu0 %2315
  %2317 = vrot.lane.b32.xlu0 %v2066, 30
  %v2318 = vpop.permute.xlu0 %2317
  %2319 = vrot.lane.b32.xlu0 %v2067, 30
  %v2320 = vpop.permute.xlu0 %2319
  %2321 = vrot.lane.b32.xlu0 %v2068, 30
  %v2322 = vpop.permute.xlu0 %2321
  %2323 = vrot.lane.b32.xlu0 %v2069, 30
  %v2324 = vpop.permute.xlu0 %2323
  %2325 = vrot.lane.b32.xlu0 %v2070, 30
  %v2326 = vpop.permute.xlu0 %2325
  %2327 = vrot.lane.b32.xlu0 %v2071, 30
  %v2328 = vpop.permute.xlu0 %2327
  %2329 = vrot.lane.b32.xlu0 %v2072, 30
  %v2330 = vpop.permute.xlu0 %2329
  %v2331 = vsel %vm1789, %v2312, %v2314
  %v2332 = vsel %vm1789, %v2314, %v2316
  %v2333 = vsel %vm1789, %v2316, %v2318
  %v2334 = vsel %vm1789, %v2318, %v2320
  %v2335 = vsel %vm1789, %v2320, %v2322
  %v2336 = vsel %vm1789, %v2322, %v2324
  %v2337 = vsel %vm1789, %v2324, %v2326
  %v2338 = vsel %vm1789, %v2326, %v2328
  %v2339 = vsel %vm1789, %v2328, %v2330
  %2349 = vrot.lane.b32.xlu0 %v2063, 28
  %v2350 = vpop.permute.xlu0 %2349
  %2351 = vrot.lane.b32.xlu0 %v2064, 28
  %v2352 = vpop.permute.xlu0 %2351
  %2353 = vrot.lane.b32.xlu0 %v2065, 28
  %v2354 = vpop.permute.xlu0 %2353
  %2355 = vrot.lane.b32.xlu0 %v2066, 28
  %v2356 = vpop.permute.xlu0 %2355
  %2357 = vrot.lane.b32.xlu0 %v2067, 28
  %v2358 = vpop.permute.xlu0 %2357
  %2359 = vrot.lane.b32.xlu0 %v2068, 28
  %v2360 = vpop.permute.xlu0 %2359
  %2361 = vrot.lane.b32.xlu0 %v2069, 28
  %v2362 = vpop.permute.xlu0 %2361
  %2363 = vrot.lane.b32.xlu0 %v2070, 28
  %v2364 = vpop.permute.xlu0 %2363
  %2365 = vrot.lane.b32.xlu0 %v2071, 28
  %v2366 = vpop.permute.xlu0 %2365
  %2367 = vrot.lane.b32.xlu0 %v2072, 28
  %v2368 = vpop.permute.xlu0 %2367
  %v2369 = vsel %vm1832, %v2350, %v2352
  %v2370 = vsel %vm1832, %v2352, %v2354
  %v2371 = vsel %vm1832, %v2354, %v2356
  %v2372 = vsel %vm1832, %v2356, %v2358
  %v2373 = vsel %vm1832, %v2358, %v2360
  %v2374 = vsel %vm1832, %v2360, %v2362
  %v2375 = vsel %vm1832, %v2362, %v2364
  %v2376 = vsel %vm1832, %v2364, %v2366
  %v2377 = vsel %vm1832, %v2366, %v2368
  %v2387 = vld [vmem:[%s7] sm:$0xff]
  %v2388 = vld [vmem:[%s8] sm:$0xff]
  %2390 = vset.pattern.permute.xlu0 0
  %2391 = vperm.xlu0 %2390, %v2388
  %v2392 = vpop.permute.xlu0 %2391
  %v2395 = vsel %vm453, %v2387, 0
  %2397 = vmatpush.msra.mxu0 0.0
  %2398 = vmatpush.msra.mxu0 0.0
  %2399 = vmatpush.msra.mxu0 0.0
  %2400 = vmatpush.msra.mxu0 0.0
  %2401 = vmatpush.msra.mxu0 0.0
  %2402 = vmatpush.msra.mxu0 0.0
  %2403 = vmatpush.msra.mxu0 0.0
  %2404 = vmatpush.msra.mxu0 %v2369
  %2405 = vmatpush.msra.mxu0 %v2331
  %2406 = vmatpush.msra.mxu0 %v2293
  %2407 = vmatpush.msra.mxu0 %v2255
  %2408 = vmatpush.msra.mxu0 %v2217
  %2409 = vmatpush.msra.mxu0 %v2179
  %2410 = vmatpush.msra.mxu0 %v2141
  %2411 = vmatpush.msra.mxu0 %v2103
  %2412 = vmatpush.msra.mxu0 %v2063
  %2413 = vmatmul.f32.gmra.mxu0 %v2395
  %v2414 = vpop.f32.mrf.mxu0
  %v2415 = vadd.f32 %v2392, %v2414
  %2416 = vdwg.mxu0
  %2417 = vmatpush.msra.mxu0 0.0
  %2418 = vmatpush.msra.mxu0 0.0
  %2419 = vmatpush.msra.mxu0 0.0
  %2420 = vmatpush.msra.mxu0 0.0
  %2421 = vmatpush.msra.mxu0 0.0
  %2422 = vmatpush.msra.mxu0 0.0
  %2423 = vmatpush.msra.mxu0 0.0
  %2424 = vmatpush.msra.mxu0 %v2370
  %2425 = vmatpush.msra.mxu0 %v2332
  %2426 = vmatpush.msra.mxu0 %v2294
  %2427 = vmatpush.msra.mxu0 %v2256
  %2428 = vmatpush.msra.mxu0 %v2218
  %2429 = vmatpush.msra.mxu0 %v2180
  %2430 = vmatpush.msra.mxu0 %v2142
  %2431 = vmatpush.msra.mxu0 %v2104
  %2432 = vmatpush.msra.mxu0 %v2064
  %2433 = vmatmul.f32.gmra.mxu0 %v2395
  %v2434 = vpop.f32.mrf.mxu0
  %v2435 = vadd.f32 %v2392, %v2434
  %2436 = vdwg.mxu0
  %2437 = vmatpush.msra.mxu0 0.0
  %2438 = vmatpush.msra.mxu0 0.0
  %2439 = vmatpush.msra.mxu0 0.0
  %2440 = vmatpush.msra.mxu0 0.0
  %2441 = vmatpush.msra.mxu0 0.0
  %2442 = vmatpush.msra.mxu0 0.0
  %2443 = vmatpush.msra.mxu0 0.0
  %2444 = vmatpush.msra.mxu0 %v2371
  %2445 = vmatpush.msra.mxu0 %v2333
  %2446 = vmatpush.msra.mxu0 %v2295
  %2447 = vmatpush.msra.mxu0 %v2257
  %2448 = vmatpush.msra.mxu0 %v2219
  %2449 = vmatpush.msra.mxu0 %v2181
  %2450 = vmatpush.msra.mxu0 %v2143
  %2451 = vmatpush.msra.mxu0 %v2105
  %2452 = vmatpush.msra.mxu0 %v2065
  %2453 = vmatmul.f32.gmra.mxu0 %v2395
  %v2454 = vpop.f32.mrf.mxu0
  %v2455 = vadd.f32 %v2392, %v2454
  %2456 = vdwg.mxu0
  %2457 = vmatpush.msra.mxu0 0.0
  %2458 = vmatpush.msra.mxu0 0.0
  %2459 = vmatpush.msra.mxu0 0.0
  %2460 = vmatpush.msra.mxu0 0.0
  %2461 = vmatpush.msra.mxu0 0.0
  %2462 = vmatpush.msra.mxu0 0.0
  %2463 = vmatpush.msra.mxu0 0.0
  %2464 = vmatpush.msra.mxu0 %v2372
  %2465 = vmatpush.msra.mxu0 %v2334
  %2466 = vmatpush.msra.mxu0 %v2296
  %2467 = vmatpush.msra.mxu0 %v2258
  %2468 = vmatpush.msra.mxu0 %v2220
  %2469 = vmatpush.msra.mxu0 %v2182
  %2470 = vmatpush.msra.mxu0 %v2144
  %2471 = vmatpush.msra.mxu0 %v2106
  %2472 = vmatpush.msra.mxu0 %v2066
  %2473 = vmatmul.f32.gmra.mxu0 %v2395
  %v2474 = vpop.f32.mrf.mxu0
  %v2475 = vadd.f32 %v2392, %v2474
  %2476 = vdwg.mxu0
  %2477 = vmatpush.msra.mxu0 0.0
  %2478 = vmatpush.msra.mxu0 0.0
  %2479 = vmatpush.msra.mxu0 0.0
  %2480 = vmatpush.msra.mxu0 0.0
  %2481 = vmatpush.msra.mxu0 0.0
  %2482 = vmatpush.msra.mxu0 0.0
  %2483 = vmatpush.msra.mxu0 0.0
  %2484 = vmatpush.msra.mxu0 %v2373
  %2485 = vmatpush.msra.mxu0 %v2335
  %2486 = vmatpush.msra.mxu0 %v2297
  %2487 = vmatpush.msra.mxu0 %v2259
  %2488 = vmatpush.msra.mxu0 %v2221
  %2489 = vmatpush.msra.mxu0 %v2183
  %2490 = vmatpush.msra.mxu0 %v2145
  %2491 = vmatpush.msra.mxu0 %v2107
  %2492 = vmatpush.msra.mxu0 %v2067
  %2493 = vmatmul.f32.gmra.mxu0 %v2395
  %v2494 = vpop.f32.mrf.mxu0
  %v2495 = vadd.f32 %v2392, %v2494
  %2496 = vdwg.mxu0
  %2497 = vmatpush.msra.mxu0 0.0
  %2498 = vmatpush.msra.mxu0 0.0
  %2499 = vmatpush.msra.mxu0 0.0
  %2500 = vmatpush.msra.mxu0 0.0
  %2501 = vmatpush.msra.mxu0 0.0
  %2502 = vmatpush.msra.mxu0 0.0
  %2503 = vmatpush.msra.mxu0 0.0
  %2504 = vmatpush.msra.mxu0 %v2374
  %2505 = vmatpush.msra.mxu0 %v2336
  %2506 = vmatpush.msra.mxu0 %v2298
  %2507 = vmatpush.msra.mxu0 %v2260
  %2508 = vmatpush.msra.mxu0 %v2222
  %2509 = vmatpush.msra.mxu0 %v2184
  %2510 = vmatpush.msra.mxu0 %v2146
  %2511 = vmatpush.msra.mxu0 %v2108
  %2512 = vmatpush.msra.mxu0 %v2068
  %2513 = vmatmul.f32.gmra.mxu0 %v2395
  %v2514 = vpop.f32.mrf.mxu0
  %v2515 = vadd.f32 %v2392, %v2514
  %2516 = vdwg.mxu0
  %2517 = vmatpush.msra.mxu0 0.0
  %2518 = vmatpush.msra.mxu0 0.0
  %2519 = vmatpush.msra.mxu0 0.0
  %2520 = vmatpush.msra.mxu0 0.0
  %2521 = vmatpush.msra.mxu0 0.0
  %2522 = vmatpush.msra.mxu0 0.0
  %2523 = vmatpush.msra.mxu0 0.0
  %2524 = vmatpush.msra.mxu0 %v2375
  %2525 = vmatpush.msra.mxu0 %v2337
  %2526 = vmatpush.msra.mxu0 %v2299
  %2527 = vmatpush.msra.mxu0 %v2261
  %2528 = vmatpush.msra.mxu0 %v2223
  %2529 = vmatpush.msra.mxu0 %v2185
  %2530 = vmatpush.msra.mxu0 %v2147
  %2531 = vmatpush.msra.mxu0 %v2109
  %2532 = vmatpush.msra.mxu0 %v2069
  %2533 = vmatmul.f32.gmra.mxu0 %v2395
  %v2534 = vpop.f32.mrf.mxu0
  %v2535 = vadd.f32 %v2392, %v2534
  %2536 = vdwg.mxu0
  %2537 = vmatpush.msra.mxu0 0.0
  %2538 = vmatpush.msra.mxu0 0.0
  %2539 = vmatpush.msra.mxu0 0.0
  %2540 = vmatpush.msra.mxu0 0.0
  %2541 = vmatpush.msra.mxu0 0.0
  %2542 = vmatpush.msra.mxu0 0.0
  %2543 = vmatpush.msra.mxu0 0.0
  %2544 = vmatpush.msra.mxu0 %v2376
  %2545 = vmatpush.msra.mxu0 %v2338
  %2546 = vmatpush.msra.mxu0 %v2300
  %2547 = vmatpush.msra.mxu0 %v2262
  %2548 = vmatpush.msra.mxu0 %v2224
  %2549 = vmatpush.msra.mxu0 %v2186
  %2550 = vmatpush.msra.mxu0 %v2148
  %2551 = vmatpush.msra.mxu0 %v2110
  %2552 = vmatpush.msra.mxu0 %v2070
  %2553 = vmatmul.f32.gmra.mxu0 %v2395
  %v2554 = vpop.f32.mrf.mxu0
  %v2555 = vadd.f32 %v2392, %v2554
  %2556 = vdwg.mxu0
  %2557 = vmatpush.msra.mxu0 0.0
  %2558 = vmatpush.msra.mxu0 0.0
  %2559 = vmatpush.msra.mxu0 0.0
  %2560 = vmatpush.msra.mxu0 0.0
  %2561 = vmatpush.msra.mxu0 0.0
  %2562 = vmatpush.msra.mxu0 0.0
  %2563 = vmatpush.msra.mxu0 0.0
  %2564 = vmatpush.msra.mxu0 %v2377
  %2565 = vmatpush.msra.mxu0 %v2339
  %2566 = vmatpush.msra.mxu0 %v2301
  %2567 = vmatpush.msra.mxu0 %v2263
  %2568 = vmatpush.msra.mxu0 %v2225
  %2569 = vmatpush.msra.mxu0 %v2187
  %2570 = vmatpush.msra.mxu0 %v2149
  %2571 = vmatpush.msra.mxu0 %v2111
  %2572 = vmatpush.msra.mxu0 %v2071
  %2573 = vmatmul.f32.gmra.mxu0 %v2395
  %v2574 = vpop.f32.mrf.mxu0
  %v2575 = vadd.f32 %v2392, %v2574
  %2576 = vdwg.mxu0
  %v2577 = vmax.f32 %v2415, 0.0
  %v2578 = vmax.f32 %v2435, 0.0
  %v2579 = vmax.f32 %v2455, 0.0
  %v2580 = vmax.f32 %v2475, 0.0
  %v2581 = vmax.f32 %v2495, 0.0
  %v2582 = vmax.f32 %v2515, 0.0
  %v2583 = vmax.f32 %v2535, 0.0
  %v2584 = vmax.f32 %v2555, 0.0
  %v2585 = vmax.f32 %v2575, 0.0
  %2594 = vrot.lane.b32.xlu0 %v2577, 126
  %v2595 = vpop.permute.xlu0 %2594
  %2596 = vrot.lane.b32.xlu0 %v2578, 126
  %v2597 = vpop.permute.xlu0 %2596
  %2598 = vrot.lane.b32.xlu0 %v2579, 126
  %v2599 = vpop.permute.xlu0 %2598
  %2600 = vrot.lane.b32.xlu0 %v2580, 126
  %v2601 = vpop.permute.xlu0 %2600
  %2602 = vrot.lane.b32.xlu0 %v2581, 126
  %v2603 = vpop.permute.xlu0 %2602
  %2604 = vrot.lane.b32.xlu0 %v2582, 126
  %v2605 = vpop.permute.xlu0 %2604
  %2606 = vrot.lane.b32.xlu0 %v2583, 126
  %v2607 = vpop.permute.xlu0 %2606
  %2608 = vrot.lane.b32.xlu0 %v2584, 126
  %v2609 = vpop.permute.xlu0 %2608
  %v2610 = vsel %vm134, %v2595, %v2597
  %v2611 = vsel %vm134, %v2597, %v2599
  %v2612 = vsel %vm134, %v2599, %v2601
  %v2613 = vsel %vm134, %v2603, %v2605
  %v2614 = vsel %vm134, %v2605, %v2607
  %v2615 = vsel %vm134, %v2607, %v2609
  %v2622 = vmax.f32 %v2577, %v2610
  %v2623 = vmax.f32 %v2578, %v2611
  %v2624 = vmax.f32 %v2579, %v2612
  %v2625 = vmax.f32 %v2581, %v2613
  %v2626 = vmax.f32 %v2582, %v2614
  %v2627 = vmax.f32 %v2583, %v2615
  %2629 = vrot.lane.b32.xlu0 %v2585, 126
  %v2630 = vpop.permute.xlu0 %2629
  %v2631 = vsel %vm134, %v2601, %v2603
  %v2632 = vsel %vm134, %v2609, %v2630
  %v2635 = vmax.f32 %v2580, %v2631
  %v2636 = vmax.f32 %v2584, %v2632
  %2645 = vrot.lane.b32.xlu0 %v2622, 80
  %v2646 = vpop.permute.xlu0 %2645
  %2647 = vrot.lane.b32.xlu0 %v2623, 80
  %v2648 = vpop.permute.xlu0 %2647
  %2649 = vrot.lane.b32.xlu0 %v2624, 80
  %v2650 = vpop.permute.xlu0 %2649
  %2651 = vrot.lane.b32.xlu0 %v2635, 80
  %v2652 = vpop.permute.xlu0 %2651
  %2653 = vrot.lane.b32.xlu0 %v2625, 80
  %v2654 = vpop.permute.xlu0 %2653
  %2655 = vrot.lane.b32.xlu0 %v2626, 80
  %v2656 = vpop.permute.xlu0 %2655
  %2657 = vrot.lane.b32.xlu0 %v2627, 80
  %v2658 = vpop.permute.xlu0 %2657
  %2659 = vrot.lane.b32.xlu0 %v2636, 80
  %v2660 = vpop.permute.xlu0 %2659
  %v2661 = vsel %vm326, %v2646, %v2648
  %v2662 = vsel %vm326, %v2648, %v2650
  %v2663 = vsel %vm326, %v2650, %v2652
  %v2664 = vsel %vm326, %v2654, %v2656
  %v2665 = vsel %vm326, %v2656, %v2658
  %v2666 = vsel %vm326, %v2658, %v2660
  %v2673 = vmax.f32 %v2622, %v2661
  %v2674 = vmax.f32 %v2623, %v2662
  %v2675 = vmax.f32 %v2624, %v2663
  %v2676 = vmax.f32 %v2625, %v2664
  %v2677 = vmax.f32 %v2626, %v2665
  %v2678 = vmax.f32 %v2627, %v2666
  %2682 = vrot.lane.b32.xlu0 %v2673, 124
  %v2683 = vpop.permute.xlu0 %2682
  %2684 = vrot.lane.b32.xlu0 %v2674, 124
  %v2685 = vpop.permute.xlu0 %2684
  %2686 = vrot.lane.b32.xlu0 %v2676, 124
  %v2687 = vpop.permute.xlu0 %2686
  %v2688 = vsel %vm1576, %v2683, %v2685
  %2691 = vrot.lane.b32.xlu0 %v2673, 120
  %v2692 = vpop.permute.xlu0 %2691
  %2693 = vrot.lane.b32.xlu0 %v2674, 120
  %v2694 = vpop.permute.xlu0 %2693
  %2695 = vrot.lane.b32.xlu0 %v2676, 120
  %v2696 = vpop.permute.xlu0 %2695
  %vm2697 = vcmask 982016
  %v2698 = vsel %vm2697, %v2692, %v2694
  %2702 = vrot.lane.b32.xlu0 %v2673, 32
  %v2703 = vpop.permute.xlu0 %2702
  %2704 = vrot.lane.b32.xlu0 %v2674, 32
  %v2705 = vpop.permute.xlu0 %2704
  %2706 = vrot.lane.b32.xlu0 %v2676, 32
  %v2707 = vpop.permute.xlu0 %2706
  %2708 = vrot.lane.b32.xlu0 %v2677, 32
  %v2709 = vpop.permute.xlu0 %2708
  %v2710 = vsel %vm1746, %v2703, %v2705
  %v2711 = vsel %vm1746, %v2707, %v2709
  %2714 = vrot.lane.b32.xlu0 %v2673, 28
  %v2715 = vpop.permute.xlu0 %2714
  %2716 = vrot.lane.b32.xlu0 %v2674, 28
  %v2717 = vpop.permute.xlu0 %2716
  %2718 = vrot.lane.b32.xlu0 %v2676, 28
  %v2719 = vpop.permute.xlu0 %2718
  %2720 = vrot.lane.b32.xlu0 %v2677, 28
  %v2721 = vpop.permute.xlu0 %2720
  %v2722 = vsel %vm1832, %v2715, %v2717
  %v2723 = vsel %vm1832, %v2719, %v2721
  %2726 = vrot.lane.b32.xlu0 %v2673, 24
  %v2727 = vpop.permute.xlu0 %2726
  %2728 = vrot.lane.b32.xlu0 %v2674, 24
  %v2729 = vpop.permute.xlu0 %2728
  %2730 = vrot.lane.b32.xlu0 %v2676, 24
  %v2731 = vpop.permute.xlu0 %2730
  %2732 = vrot.lane.b32.xlu0 %v2677, 24
  %v2733 = vpop.permute.xlu0 %2732
  %vm2734 = vcmask 195584
  %v2735 = vsel %vm2734, %v2727, %v2729
  %v2736 = vsel %vm2734, %v2731, %v2733
  %2741 = vrot.lane.b32.xlu0 %v2674, 64
  %v2742 = vpop.permute.xlu0 %2741
  %2743 = vrot.lane.b32.xlu0 %v2675, 64
  %v2744 = vpop.permute.xlu0 %2743
  %2745 = vrot.lane.b32.xlu0 %v2677, 64
  %v2746 = vpop.permute.xlu0 %2745
  %2747 = vrot.lane.b32.xlu0 %v2678, 64
  %v2748 = vpop.permute.xlu0 %2747
  %vm2749 = vcmask 523264
  %v2750 = vsel %vm2749, %v2742, %v2744
  %v2751 = vsel %vm2749, %v2746, %v2748
  %2754 = vrot.lane.b32.xlu0 %v2674, 60
  %v2755 = vpop.permute.xlu0 %2754
  %2756 = vrot.lane.b32.xlu0 %v2675, 60
  %v2757 = vpop.permute.xlu0 %2756
  %2758 = vrot.lane.b32.xlu0 %v2677, 60
  %v2759 = vpop.permute.xlu0 %2758
  %2760 = vrot.lane.b32.xlu0 %v2678, 60
  %v2761 = vpop.permute.xlu0 %2760
  %vm2762 = vcmask 490496
  %v2763 = vsel %vm2762, %v2755, %v2757
  %v2764 = vsel %vm2762, %v2759, %v2761
  %2767 = vrot.lane.b32.xlu0 %v2674, 56
  %v2768 = vpop.permute.xlu0 %2767
  %2769 = vrot.lane.b32.xlu0 %v2675, 56
  %v2770 = vpop.permute.xlu0 %2769
  %2771 = vrot.lane.b32.xlu0 %v2677, 56
  %v2772 = vpop.permute.xlu0 %2771
  %2773 = vrot.lane.b32.xlu0 %v2678, 56
  %v2774 = vpop.permute.xlu0 %2773
  %vm2775 = vcmask 457728
  %v2776 = vsel %vm2775, %v2768, %v2770
  %v2777 = vsel %vm2775, %v2772, %v2774
  %v2780 = vld [vmem:[%s9] sm:$0x7]
  %v2781 = vld [vmem:[%s10] sm:$0x7]
  %2783 = vset.pattern.permute.xlu0 0
  %2784 = vperm.xlu0 %2783, %v2781
  %v2785 = vpop.permute.xlu0 %2784
  %v2788 = vsel %vm453, %v2780, 0
  %2790 = vmatpush.msra.mxu0 0.0
  %2791 = vmatpush.msra.mxu0 0.0
  %2792 = vmatpush.msra.mxu0 0.0
  %2793 = vmatpush.msra.mxu0 0.0
  %2794 = vmatpush.msra.mxu0 0.0
  %2795 = vmatpush.msra.mxu0 0.0
  %2796 = vmatpush.msra.mxu0 0.0
  %2797 = vmatpush.msra.mxu0 %v2776
  %2798 = vmatpush.msra.mxu0 %v2763
  %2799 = vmatpush.msra.mxu0 %v2750
  %2800 = vmatpush.msra.mxu0 %v2735
  %2801 = vmatpush.msra.mxu0 %v2722
  %2802 = vmatpush.msra.mxu0 %v2710
  %2803 = vmatpush.msra.mxu0 %v2698
  %2804 = vmatpush.msra.mxu0 %v2688
  %2805 = vmatpush.msra.mxu0 %v2673
  %2806 = vmatmul.f32.gmra.mxu0 %v2788
  %v2807 = vpop.f32.mrf.mxu0
  %v2808 = vadd.f32 %v2785, %v2807
  %2809 = vdwg.mxu0
  %2810 = vmatpush.msra.mxu0 0.0
  %2811 = vmatpush.msra.mxu0 0.0
  %2812 = vmatpush.msra.mxu0 0.0
  %2813 = vmatpush.msra.mxu0 0.0
  %2814 = vmatpush.msra.mxu0 0.0
  %2815 = vmatpush.msra.mxu0 0.0
  %2816 = vmatpush.msra.mxu0 0.0
  %2817 = vmatpush.msra.mxu0 %v2777
  %2818 = vmatpush.msra.mxu0 %v2764
  %2819 = vmatpush.msra.mxu0 %v2751
  %2820 = vmatpush.msra.mxu0 %v2736
  %2821 = vmatpush.msra.mxu0 %v2723
  %2822 = vmatpush.msra.mxu0 %v2711
  %2823 = vmatpush.msra.mxu0 %v2696
  %2824 = vmatpush.msra.mxu0 %v2687
  %2825 = vmatpush.msra.mxu0 %v2676
  %2826 = vmatmul.f32.gmra.mxu0 %v2788
  %v2827 = vpop.f32.mrf.mxu0
  %v2828 = vadd.f32 %v2785, %v2827
  %2829 = vdwg.mxu0
  %2831 = vrot.lane.b32.xlu0 %v2828, 65
  %v2832 = vpop.permute.xlu0 %2831
  %vm2834 = vcmask 7168
  %v2835 = vsel %vm2834, %v2808, %v2832
  %vm2836 = vcmask 10240
  %2837 = vst.msk [vmem:[%s11] sm:$0x7] %vm2836, %v2835
  // Predicated region
  $region46: #{tinyvgg_forward.1} parent=0 // pred_check
    _
  $region47: #{tinyvgg_forward.1} parent=0 // pred_check_branch
    %2839 = sbr.rel (0) target = $region49
  $region48: #{tinyvgg_forward.1} parent=0 // pred_region
    _
  $region49: #{tinyvgg_forward.1} parent=0 // pred_fallthru
    _
  // Predicated region
  $region50: #{tinyvgg_forward.1} parent=0 // pred_check
    _
  $region51: #{tinyvgg_forward.1} parent=0 // pred_check_branch
    %2841 = sbr.rel (0) target = $region53
  $region52: #{tinyvgg_forward.1} parent=0 // pred_region
    _
  $region53: #{tinyvgg_forward.1} parent=0 // pred_fallthru
    _

</llo_original>
